<compile_context>
chip_gen: v7x
topology: tpu7x:2x2x1
jax: 0.10.0
libtpu: 0.0.40
codegen_flags: <defaults>
</compile_context>

<pallas_src>
import jax
import jax.numpy as jnp
from jax.experimental import pallas as pl
from jax.experimental.pallas import tpu as pltpu


def _round_up(n, m):
    return ((n + m - 1) // m) * m


def _cdiv(a, b):
    return -(-a // b)


# ----------------------------------------------------------------------------- kernel


def literal_embeddings_kernel(idx_ref, x_ref, emb_ref, w1_ref, b1_ref, w2_ref, b2_ref,
                              out_ref, t_ref):
    # idx_ref: [TB, 1] i32          x_ref: [TB, Dp] bf16
    # emb_ref: [Np, Dp] bf16        w1_ref: [Hp, Hp] bf16    b1_ref: [1, Hp] f32
    # w2_ref: [Hp, Pp] bf16         b2_ref: [1, Pp] f32
    # out_ref: [TB, Pp] f32         t_ref (scratch): [TB, Hp] bf16
    tb, dp = x_ref.shape
    np_ = emb_ref.shape[0]

    idx = idx_ref[...]                                               # [TB, 1]
    x = x_ref[...]                                                   # [TB, Dp] bf16

    # Fused embedding gather: one-hot(idx) @ table (exact row select, f32 accumulate).
    iota = jax.lax.broadcasted_iota(jnp.int32, (tb, np_), 1)
    onehot = (idx == iota).astype(jnp.bfloat16)                      # [TB, Np]
    rel = jnp.dot(onehot, emb_ref[...],
                  preferred_element_type=jnp.float32)                # [TB, Dp] f32 (exact bf16 rows)

    # Build t = concat([x, rel]) with two lane-aligned stores (Dp % 128 == 0).
    t_ref[:, :dp] = x
    t_ref[:, dp:] = rel.astype(jnp.bfloat16)
    t = t_ref[...]                                                   # [TB, Hp] bf16

    # fc1: single matmul over the full padded tuple embedding.
    h = jnp.dot(t, w1_ref[...], preferred_element_type=jnp.float32) + b1_ref[...]
    h = jnp.maximum(h, 0.0)                                          # ReLU
    # dropout -> identity (inference semantics)

    # fc2(h + t): single matmul, contraction width Hp.
    ht = h + t.astype(jnp.float32)
    out = jnp.dot(ht.astype(jnp.bfloat16), w2_ref[...],
                  preferred_element_type=jnp.float32) + b2_ref[...]
    out_ref[...] = out.astype(out_ref.dtype)


# ---------------------------------------------------------------- one-time weight prep


def prepare_literal_embeddings_params(emb_table, w1, b1, w2, b2):
    """One-time padding / layout-scatter / bf16 cast of the module parameters.

    Weight convention (math layout, i.e. PyTorch `weight.T`):
      emb_table: [P, D]   w1: [2D, 2D]   b1: [2D] or [1, 2D]   w2: [2D, P]   b2: [P] or [1, P]

    Padded layout: original feature k < D  -> padded column k
                   original feature k >= D -> padded column Dp + (k - D)
    so that the in-kernel `h + t` add is a plain lane-aligned VPU add.
    """
    f32, bf16 = jnp.float32, jnp.bfloat16
    Pn, D = emb_table.shape
    H = 2 * D
    Dp = _round_up(D, 128)           # full-lane contraction / slice alignment
    Hp = 2 * Dp
    Pp = _round_up(Pn, 128)          # lane-dense output columns
    Np = _round_up(Pn, 128)          # padded embedding-table rows / one-hot lanes

    Ep = jnp.zeros((Np, Dp), bf16).at[:Pn, :D].set(emb_table.astype(bf16))

    w1 = w1.astype(f32)
    w1p = jnp.zeros((Hp, Hp), f32)
    w1p = w1p.at[:D, :D].set(w1[:D, :D])
    w1p = w1p.at[:D, Dp:Dp + D].set(w1[:D, D:])
    w1p = w1p.at[Dp:Dp + D, :D].set(w1[D:, :D])
    w1p = w1p.at[Dp:Dp + D, Dp:Dp + D].set(w1[D:, D:])
    w1p = w1p.astype(bf16)

    b1f = jnp.reshape(b1, (-1,)).astype(f32)
    b1p = jnp.zeros((1, Hp), f32).at[0, :D].set(b1f[:D]).at[0, Dp:Dp + D].set(b1f[D:])

    w2 = w2.astype(f32)
    w2p = jnp.zeros((Hp, Pp), f32)
    w2p = w2p.at[:D, :Pn].set(w2[:D, :])
    w2p = w2p.at[Dp:Dp + D, :Pn].set(w2[D:, :])
    w2p = w2p.astype(bf16)

    b2p = jnp.zeros((1, Pp), f32).at[0, :Pn].set(jnp.reshape(b2, (-1,)).astype(f32))

    return dict(Ep=Ep, w1p=w1p, b1p=b1p, w2p=w2p, b2p=b2p,
                D=D, H=H, Pn=Pn, Dp=Dp, Hp=Hp, Pp=Pp, Np=Np)


# ------------------------------------------------------------------------------ forward


def literal_embeddings_forward(x, relation_idx, params, *, tile_b=256):
    """x: [B, D] f32, relation_idx: [B] int. Returns [B, P] f32."""
    f32, bf16 = jnp.float32, jnp.bfloat16
    B, D = x.shape
    assert D == params["D"], (D, params["D"])
    Dp, Hp, Pp, Np, Pn = (params["Dp"], params["Hp"], params["Pp"],
                          params["Np"], params["Pn"])
    Ep, w1p, b1p, w2p, b2p = (params["Ep"], params["w1p"], params["b1p"],
                              params["w2p"], params["b2p"])

    # Batch tiling: aim for >= 8 grid steps (megacore sharding + pipelined x/out DMA),
    # TB a multiple of 16 for bf16 sublane packing.
    n_target = 8
    TB = min(tile_b, max(16, _round_up(_cdiv(B, n_target), 16)))
    Bp = _round_up(B, TB)
    grid = (Bp // TB,)

    # Per-call activation padding only (weights were prepared once).
    xp = jnp.zeros((Bp, Dp), bf16).at[:B, :D].set(x.astype(bf16))
    idxp = jnp.zeros((Bp, 1), jnp.int32).at[:B, 0].set(relation_idx.astype(jnp.int32))

    flops = 2 * Bp * (Np * Dp + Hp * Hp + Hp * Pp)
    bytes_accessed = (Bp * Dp * 2 + Bp * 4
                      + (Np * Dp + Hp * Hp + Hp * Pp) * 2 + (Hp + Pp) * 4
                      + Bp * Pp * 4)

    def build_and_call(single_buffer_weights):
        def tiled(shape):                                 # batch-streamed tiles
            return pl.BlockSpec(shape, lambda i: (0,) * (len(shape) - 2) + (i, 0)
                                if False else (i, 0))

        def resident(shape):                              # weights: stay in VMEM
            if single_buffer_weights:
                return pl.BlockSpec(shape, lambda i: (0, 0),
                                    pipeline_mode=pl.Buffered(1))
            return pl.BlockSpec(shape, lambda i: (0, 0))

        w_bytes = (Np * Dp + Hp * Hp + Hp * Pp) * 2 + (Hp + Pp) * 4
        act_bytes = TB * Dp * 2 + TB * 128 * 4 + TB * Pp * 4 + TB * Hp * 2
        needed = w_bytes * (1 if single_buffer_weights else 2) + 2 * act_bytes
        vmem_limit = int(min(100 * 2 ** 20, max(32 * 2 ** 20, needed * 3 // 2)))

        return pl.pallas_call(
            literal_embeddings_kernel,
            out_shape=jax.ShapeDtypeStruct((Bp, Pp), f32),
            grid=grid,
            in_specs=[
                tiled((TB, 1)),          # relation_idx
                tiled((TB, Dp)),         # x (bf16)
                resident((Np, Dp)),      # embedding table (bf16)
                resident((Hp, Hp)),      # w1 (bf16, padded/scattered)
                resident((1, Hp)),       # b1 (f32)
                resident((Hp, Pp)),      # w2 (bf16, padded/scattered)
                resident((1, Pp)),       # b2 (f32)
            ],
            out_specs=tiled((TB, Pp)),
            scratch_shapes=[pltpu.VMEM((TB, Hp), bf16)],   # t = [x | rel]
            compiler_params=pltpu.CompilerParams(
                dimension_semantics=("parallel",),
                vmem_limit_bytes=vmem_limit),
            cost_estimate=pl.CostEstimate(flops=flops, transcendentals=0,
                                          bytes_accessed=bytes_accessed),
        )(idxp, xp, Ep, w1p, b1p, w2p, b2p)

    try:
        out_padded = jax.block_until_ready(build_and_call(True))
    except Exception:
        # pipeline_mode=pl.Buffered(1) not supported on this jax build -> default buffering.
        out_padded = jax.block_until_ready(build_and_call(False))

    return out_padded[:B, :Pn]


# ---------------------------------------------------------------------- synthetic setup


def init_params(key, num_props, emb_dim):
    """Deterministic synthetic parameter init (math layout: x @ W + b)."""
    k_emb, k_w1, k_b1, k_w2, k_b2 = jax.random.split(key, 5)
    two_d = 2 * emb_dim
    emb_table = jax.random.normal(k_emb, (num_props, emb_dim), jnp.float32)
    w1 = jax.random.normal(k_w1, (two_d, two_d), jnp.float32) * (1.0 / jnp.sqrt(two_d))
    b1 = jax.random.normal(k_b1, (1, two_d), jnp.float32) * 0.01
    w2 = jax.random.normal(k_w2, (two_d, num_props), jnp.float32) * (1.0 / jnp.sqrt(two_d))
    b2 = jax.random.normal(k_b2, (1, num_props), jnp.float32) * 0.01
    return emb_table, w1, b1, w2, b2


def reference_forward(x, relation_idx, emb_table, w1, b1, w2, b2):
    """Pure-JAX f32 reference (mirrors the PyTorch module, dropout = identity)."""
    rel = emb_table[relation_idx]
    t = jnp.concatenate([x, rel], axis=1)
    h = jnp.maximum(t @ w1 + b1, 0.0)
    return (h + t) @ w2 + b2


if __name__ == "__main__":
    # Small shapes: batch=8, embedding_dims=32, num_of_data_properties=16
    B, D, P = 8, 32, 16
    key = jax.random.PRNGKey(0)
    k_x, k_idx, k_params = jax.random.split(key, 3)

    x = jax.random.normal(k_x, (B, D), jnp.float32)
    relation_idx = jax.random.randint(k_idx, (B,), 0, P, jnp.int32)
    emb_table, w1, b1, w2, b2 = init_params(k_params, P, D)

    prepared = prepare_literal_embeddings_params(emb_table, w1, b1, w2, b2)
    out = literal_embeddings_forward(x, relation_idx, prepared)
    out = jax.block_until_ready(out)

    ref = reference_forward(x, relation_idx, emb_table, w1, b1, w2, b2)
    assert out.shape == (B, P), out.shape
    # Kernel feeds the MXU bf16 inputs (f32 accumulation) -> compare with bf16-level tolerance.
    scale = jnp.maximum(jnp.max(jnp.abs(ref)), 1.0)
    err = jnp.max(jnp.abs(out - ref))
    assert err <= 0.08 * scale + 0.02, ("mismatch vs reference", float(err), float(scale))

    print("KERNEL_OK")
</pallas_src>

<mosaic_0001>
module attributes {stable_mosaic.version = 11 : i64} {
  func.func @literal_embeddings_kernel(%arg0: i32, %arg1: memref<16x1xi32, #tpu.memory_space<vmem>>, %arg2: memref<16x128xbf16, #tpu.memory_space<vmem>>, %arg3: memref<128x128xbf16, #tpu.memory_space<vmem>>, %arg4: memref<256x256xbf16, #tpu.memory_space<vmem>>, %arg5: memref<1x256xf32, #tpu.memory_space<vmem>>, %arg6: memref<256x128xbf16, #tpu.memory_space<vmem>>, %arg7: memref<1x128xf32, #tpu.memory_space<vmem>>, %arg8: memref<16x128xf32, #tpu.memory_space<vmem>>, %arg9: memref<16x256xbf16, #tpu.memory_space<vmem>>) attributes {dimension_semantics = [#tpu.dimension_semantics<parallel>], iteration_bounds = array<i64: 1>, scalar_prefetch = 0 : i64, scratch_operands = 1 : i64, tpu.core_type = #tpu.core_type<tc>, window_params = [{transform_indices = @transform_0, window_bounds = array<i64: 16, 1>}, {transform_indices = @transform_1, window_bounds = array<i64: 16, 128>}, {pipeline_mode = #tpu.pipeline_mode<synchronous>, transform_indices = @transform_2, window_bounds = array<i64: 128, 128>}, {pipeline_mode = #tpu.pipeline_mode<synchronous>, transform_indices = @transform_3, window_bounds = array<i64: 256, 256>}, {pipeline_mode = #tpu.pipeline_mode<synchronous>, transform_indices = @transform_4, window_bounds = array<i64: 1, 256>}, {pipeline_mode = #tpu.pipeline_mode<synchronous>, transform_indices = @transform_5, window_bounds = array<i64: 256, 128>}, {pipeline_mode = #tpu.pipeline_mode<synchronous>, transform_indices = @transform_6, window_bounds = array<i64: 1, 128>}, {transform_indices = @transform_7, window_bounds = array<i64: 16, 128>}]} {
    %c0 = arith.constant 0 : index
    %c0_0 = arith.constant 0 : index
    %0 = vector.load %arg1[%c0, %c0_0] : memref<16x1xi32, #tpu.memory_space<vmem>>, vector<16x1xi32>
    %c0_1 = arith.constant 0 : index
    %c0_2 = arith.constant 0 : index
    %1 = vector.load %arg2[%c0_1, %c0_2] : memref<16x128xbf16, #tpu.memory_space<vmem>>, vector<16x128xbf16>
    %2 = tpu.iota {dimensions = array<i32: 1>} : vector<16x128xi32>
    %3 = vector.broadcast %0 : vector<16x1xi32> to vector<16x128xi32>
    %4 = arith.cmpi eq, %3, %2 : vector<16x128xi32>
    %5 = arith.extui %4 : vector<16x128xi1> to vector<16x128xi32>
    %6 = arith.sitofp %5 : vector<16x128xi32> to vector<16x128xf32>
    %7 = arith.truncf %6 : vector<16x128xf32> to vector<16x128xbf16>
    %c0_3 = arith.constant 0 : index
    %c0_4 = arith.constant 0 : index
    %8 = vector.load %arg3[%c0_3, %c0_4] : memref<128x128xbf16, #tpu.memory_space<vmem>>, vector<128x128xbf16>
    %cst = arith.constant dense<0.000000e+00> : vector<16x128xf32>
    %9 = tpu.matmul %7, %8, %cst {dimension_numbers = #tpu.dot_dimension_numbers<[1], [0], [0], [1], [0, 0, 1, 1], [], []>} : vector<16x128xbf16>, vector<128x128xbf16>, vector<16x128xf32> -> vector<16x128xf32>
    %c0_5 = arith.constant 0 : index
    %c0_6 = arith.constant 0 : index
    %10 = vector.load %arg9[%c0_5, %c0_6] : memref<16x256xbf16, #tpu.memory_space<vmem>>, vector<16x128xbf16>
    tpu.vector_store %arg9[%c0_5, %c0_6], %1 {strides = array<i32>} : memref<16x256xbf16, #tpu.memory_space<vmem>>, vector<16x128xbf16>,
    %11 = arith.truncf %9 : vector<16x128xf32> to vector<16x128xbf16>
    %c0_7 = arith.constant 0 : index
    %c128 = arith.constant 128 : index
    %12 = vector.load %arg9[%c0_7, %c128] : memref<16x256xbf16, #tpu.memory_space<vmem>>, vector<16x128xbf16>
    tpu.vector_store %arg9[%c0_7, %c128], %11 {strides = array<i32>} : memref<16x256xbf16, #tpu.memory_space<vmem>>, vector<16x128xbf16>,
    %c0_8 = arith.constant 0 : index
    %c0_9 = arith.constant 0 : index
    %13 = vector.load %arg9[%c0_8, %c0_9] : memref<16x256xbf16, #tpu.memory_space<vmem>>, vector<16x256xbf16>
    %c0_10 = arith.constant 0 : index
    %c0_11 = arith.constant 0 : index
    %14 = vector.load %arg4[%c0_10, %c0_11] : memref<256x256xbf16, #tpu.memory_space<vmem>>, vector<256x256xbf16>
    %cst_12 = arith.constant dense<0.000000e+00> : vector<16x256xf32>
    %15 = tpu.matmul %13, %14, %cst_12 {dimension_numbers = #tpu.dot_dimension_numbers<[1], [0], [0], [1], [0, 0, 1, 1], [], []>} : vector<16x256xbf16>, vector<256x256xbf16>, vector<16x256xf32> -> vector<16x256xf32>
    %c0_13 = arith.constant 0 : index
    %c0_14 = arith.constant 0 : index
    %16 = vector.load %arg5[%c0_13, %c0_14] : memref<1x256xf32, #tpu.memory_space<vmem>>, vector<1x256xf32>
    %17 = vector.broadcast %16 : vector<1x256xf32> to vector<16x256xf32>
    %18 = arith.addf %15, %17 : vector<16x256xf32>
    %cst_15 = arith.constant 0.000000e+00 : f32
    %19 = vector.broadcast %cst_15 : f32 to vector<16x256xf32>
    %20 = arith.maximumf %18, %19 : vector<16x256xf32>
    %21 = arith.extf %13 : vector<16x256xbf16> to vector<16x256xf32>
    %22 = arith.addf %20, %21 : vector<16x256xf32>
    %23 = arith.truncf %22 : vector<16x256xf32> to vector<16x256xbf16>
    %c0_16 = arith.constant 0 : index
    %c0_17 = arith.constant 0 : index
    %24 = vector.load %arg6[%c0_16, %c0_17] : memref<256x128xbf16, #tpu.memory_space<vmem>>, vector<256x128xbf16>
    %cst_18 = arith.constant dense<0.000000e+00> : vector<16x128xf32>
    %25 = tpu.matmul %23, %24, %cst_18 {dimension_numbers = #tpu.dot_dimension_numbers<[1], [0], [0], [1], [0, 0, 1, 1], [], []>} : vector<16x256xbf16>, vector<256x128xbf16>, vector<16x128xf32> -> vector<16x128xf32>
    %c0_19 = arith.constant 0 : index
    %c0_20 = arith.constant 0 : index
    %26 = vector.load %arg7[%c0_19, %c0_20] : memref<1x128xf32, #tpu.memory_space<vmem>>, vector<1x128xf32>
    %27 = vector.broadcast %26 : vector<1x128xf32> to vector<16x128xf32>
    %28 = arith.addf %25, %27 : vector<16x128xf32>
    %c0_21 = arith.constant 0 : index
    %c0_22 = arith.constant 0 : index
    %29 = vector.load %arg8[%c0_21, %c0_22] : memref<16x128xf32, #tpu.memory_space<vmem>>, vector<16x128xf32>
    tpu.vector_store %arg8[%c0_21, %c0_22], %28 {strides = array<i32>} : memref<16x128xf32, #tpu.memory_space<vmem>>, vector<16x128xf32>,
    return
  }
  func.func @transform_0(%arg0: i32) -> (i32, i32) {
    %c0_i32 = arith.constant 0 : i32
    %c0_i32_0 = arith.constant 0 : i32
    return %arg0, %c0_i32 : i32, i32
  }
  func.func @transform_1(%arg0: i32) -> (i32, i32) {
    %c0_i32 = arith.constant 0 : i32
    %c0_i32_0 = arith.constant 0 : i32
    return %arg0, %c0_i32 : i32, i32
  }
  func.func @transform_2(%arg0: i32) -> (i32, i32) {
    %c0_i32 = arith.constant 0 : i32
    %c0_i32_0 = arith.constant 0 : i32
    %c0_i32_1 = arith.constant 0 : i32
    return %c0_i32, %c0_i32_0 : i32, i32
  }
  func.func @transform_3(%arg0: i32) -> (i32, i32) {
    %c0_i32 = arith.constant 0 : i32
    %c0_i32_0 = arith.constant 0 : i32
    %c0_i32_1 = arith.constant 0 : i32
    return %c0_i32, %c0_i32_0 : i32, i32
  }
  func.func @transform_4(%arg0: i32) -> (i32, i32) {
    %c0_i32 = arith.constant 0 : i32
    %c0_i32_0 = arith.constant 0 : i32
    %c0_i32_1 = arith.constant 0 : i32
    return %c0_i32, %c0_i32_0 : i32, i32
  }
  func.func @transform_5(%arg0: i32) -> (i32, i32) {
    %c0_i32 = arith.constant 0 : i32
    %c0_i32_0 = arith.constant 0 : i32
    %c0_i32_1 = arith.constant 0 : i32
    return %c0_i32, %c0_i32_0 : i32, i32
  }
  func.func @transform_6(%arg0: i32) -> (i32, i32) {
    %c0_i32 = arith.constant 0 : i32
    %c0_i32_0 = arith.constant 0 : i32
    %c0_i32_1 = arith.constant 0 : i32
    return %c0_i32, %c0_i32_0 : i32, i32
  }
  func.func @transform_7(%arg0: i32) -> (i32, i32) {
    %c0_i32 = arith.constant 0 : i32
    %c0_i32_0 = arith.constant 0 : i32
    return %arg0, %c0_i32 : i32, i32
  }
}

module attributes {stable_mosaic.version = 11 : i64} {
  func.func @literal_embeddings_kernel(%arg0: i32, %arg1: memref<16x1xi32, #tpu.memory_space<vmem>>, %arg2: memref<16x128xbf16, #tpu.memory_space<vmem>>, %arg3: memref<128x128xbf16, #tpu.memory_space<vmem>>, %arg4: memref<256x256xbf16, #tpu.memory_space<vmem>>, %arg5: memref<1x256xf32, #tpu.memory_space<vmem>>, %arg6: memref<256x128xbf16, #tpu.memory_space<vmem>>, %arg7: memref<1x128xf32, #tpu.memory_space<vmem>>, %arg8: memref<16x128xf32, #tpu.memory_space<vmem>>, %arg9: memref<16x256xbf16, #tpu.memory_space<vmem>>) attributes {dimension_semantics = [#tpu.dimension_semantics<parallel>], iteration_bounds = array<i64: 1>, scalar_prefetch = 0 : i64, scratch_operands = 1 : i64, tpu.core_type = #tpu.core_type<tc>, window_params = [{transform_indices = @transform_0, window_bounds = array<i64: 16, 1>}, {transform_indices = @transform_1, window_bounds = array<i64: 16, 128>}, {pipeline_mode = #tpu.pipeline_mode<synchronous>, transform_indices = @transform_2, window_bounds = array<i64: 128, 128>}, {pipeline_mode = #tpu.pipeline_mode<synchronous>, transform_indices = @transform_3, window_bounds = array<i64: 256, 256>}, {pipeline_mode = #tpu.pipeline_mode<synchronous>, transform_indices = @transform_4, window_bounds = array<i64: 1, 256>}, {pipeline_mode = #tpu.pipeline_mode<synchronous>, transform_indices = @transform_5, window_bounds = array<i64: 256, 128>}, {pipeline_mode = #tpu.pipeline_mode<synchronous>, transform_indices = @transform_6, window_bounds = array<i64: 1, 128>}, {transform_indices = @transform_7, window_bounds = array<i64: 16, 128>}]} {
    %c0 = arith.constant 0 : index
    %c0_0 = arith.constant 0 : index
    %0 = vector.load %arg1[%c0, %c0_0] : memref<16x1xi32, #tpu.memory_space<vmem>>, vector<16x1xi32>
    %c0_1 = arith.constant 0 : index
    %c0_2 = arith.constant 0 : index
    %1 = vector.load %arg2[%c0_1, %c0_2] : memref<16x128xbf16, #tpu.memory_space<vmem>>, vector<16x128xbf16>
    %2 = tpu.iota {dimensions = array<i32: 1>} : vector<16x128xi32>
    %3 = vector.broadcast %0 : vector<16x1xi32> to vector<16x128xi32>
    %4 = arith.cmpi eq, %3, %2 : vector<16x128xi32>
    %5 = arith.extui %4 : vector<16x128xi1> to vector<16x128xi32>
    %6 = arith.sitofp %5 : vector<16x128xi32> to vector<16x128xf32>
    %7 = arith.truncf %6 : vector<16x128xf32> to vector<16x128xbf16>
    %c0_3 = arith.constant 0 : index
    %c0_4 = arith.constant 0 : index
    %8 = vector.load %arg3[%c0_3, %c0_4] : memref<128x128xbf16, #tpu.memory_space<vmem>>, vector<128x128xbf16>
    %cst = arith.constant dense<0.000000e+00> : vector<16x128xf32>
    %9 = tpu.matmul %7, %8, %cst {dimension_numbers = #tpu.dot_dimension_numbers<[1], [0], [0], [1], [0, 0, 1, 1], [], []>} : vector<16x128xbf16>, vector<128x128xbf16>, vector<16x128xf32> -> vector<16x128xf32>
    %c0_5 = arith.constant 0 : index
    %c0_6 = arith.constant 0 : index
    %10 = vector.load %arg9[%c0_5, %c0_6] : memref<16x256xbf16, #tpu.memory_space<vmem>>, vector<16x128xbf16>
    tpu.vector_store %arg9[%c0_5, %c0_6], %1 {strides = array<i32>} : memref<16x256xbf16, #tpu.memory_space<vmem>>, vector<16x128xbf16>,
    %11 = arith.truncf %9 : vector<16x128xf32> to vector<16x128xbf16>
    %c0_7 = arith.constant 0 : index
    %c128 = arith.constant 128 : index
    %12 = vector.load %arg9[%c0_7, %c128] : memref<16x256xbf16, #tpu.memory_space<vmem>>, vector<16x128xbf16>
    tpu.vector_store %arg9[%c0_7, %c128], %11 {strides = array<i32>} : memref<16x256xbf16, #tpu.memory_space<vmem>>, vector<16x128xbf16>,
    %c0_8 = arith.constant 0 : index
    %c0_9 = arith.constant 0 : index
    %13 = vector.load %arg9[%c0_8, %c0_9] : memref<16x256xbf16, #tpu.memory_space<vmem>>, vector<16x256xbf16>
    %c0_10 = arith.constant 0 : index
    %c0_11 = arith.constant 0 : index
    %14 = vector.load %arg4[%c0_10, %c0_11] : memref<256x256xbf16, #tpu.memory_space<vmem>>, vector<256x256xbf16>
    %cst_12 = arith.constant dense<0.000000e+00> : vector<16x256xf32>
    %15 = tpu.matmul %13, %14, %cst_12 {dimension_numbers = #tpu.dot_dimension_numbers<[1], [0], [0], [1], [0, 0, 1, 1], [], []>} : vector<16x256xbf16>, vector<256x256xbf16>, vector<16x256xf32> -> vector<16x256xf32>
    %c0_13 = arith.constant 0 : index
    %c0_14 = arith.constant 0 : index
    %16 = vector.load %arg5[%c0_13, %c0_14] : memref<1x256xf32, #tpu.memory_space<vmem>>, vector<1x256xf32>
    %17 = vector.broadcast %16 : vector<1x256xf32> to vector<16x256xf32>
    %18 = arith.addf %15, %17 : vector<16x256xf32>
    %cst_15 = arith.constant 0.000000e+00 : f32
    %19 = vector.broadcast %cst_15 : f32 to vector<16x256xf32>
    %20 = arith.maximumf %18, %19 : vector<16x256xf32>
    %21 = arith.extf %13 : vector<16x256xbf16> to vector<16x256xf32>
    %22 = arith.addf %20, %21 : vector<16x256xf32>
    %23 = arith.truncf %22 : vector<16x256xf32> to vector<16x256xbf16>
    %c0_16 = arith.constant 0 : index
    %c0_17 = arith.constant 0 : index
    %24 = vector.load %arg6[%c0_16, %c0_17] : memref<256x128xbf16, #tpu.memory_space<vmem>>, vector<256x128xbf16>
    %cst_18 = arith.constant dense<0.000000e+00> : vector<16x128xf32>
    %25 = tpu.matmul %23, %24, %cst_18 {dimension_numbers = #tpu.dot_dimension_numbers<[1], [0], [0], [1], [0, 0, 1, 1], [], []>} : vector<16x256xbf16>, vector<256x128xbf16>, vector<16x128xf32> -> vector<16x128xf32>
    %c0_19 = arith.constant 0 : index
    %c0_20 = arith.constant 0 : index
    %26 = vector.load %arg7[%c0_19, %c0_20] : memref<1x128xf32, #tpu.memory_space<vmem>>, vector<1x128xf32>
    %27 = vector.broadcast %26 : vector<1x128xf32> to vector<16x128xf32>
    %28 = arith.addf %25, %27 : vector<16x128xf32>
    %c0_21 = arith.constant 0 : index
    %c0_22 = arith.constant 0 : index
    %29 = vector.load %arg8[%c0_21, %c0_22] : memref<16x128xf32, #tpu.memory_space<vmem>>, vector<16x128xf32>
    tpu.vector_store %arg8[%c0_21, %c0_22], %28 {strides = array<i32>} : memref<16x128xf32, #tpu.memory_space<vmem>>, vector<16x128xf32>,
    return
  }
  func.func @transform_0(%arg0: i32) -> (i32, i32) {
    %c0_i32 = arith.constant 0 : i32
    %c0_i32_0 = arith.constant 0 : i32
    return %arg0, %c0_i32 : i32, i32
  }
  func.func @transform_1(%arg0: i32) -> (i32, i32) {
    %c0_i32 = arith.constant 0 : i32
    %c0_i32_0 = arith.constant 0 : i32
    return %arg0, %c0_i32 : i32, i32
  }
  func.func @transform_2(%arg0: i32) -> (i32, i32) {
    %c0_i32 = arith.constant 0 : i32
    %c0_i32_0 = arith.constant 0 : i32
    %c0_i32_1 = arith.constant 0 : i32
    return %c0_i32, %c0_i32_0 : i32, i32
  }
  func.func @transform_3(%arg0: i32) -> (i32, i32) {
    %c0_i32 = arith.constant 0 : i32
    %c0_i32_0 = arith.constant 0 : i32
    %c0_i32_1 = arith.constant 0 : i32
    return %c0_i32, %c0_i32_0 : i32, i32
  }
  func.func @transform_4(%arg0: i32) -> (i32, i32) {
    %c0_i32 = arith.constant 0 : i32
    %c0_i32_0 = arith.constant 0 : i32
    %c0_i32_1 = arith.constant 0 : i32
    return %c0_i32, %c0_i32_0 : i32, i32
  }
  func.func @transform_5(%arg0: i32) -> (i32, i32) {
    %c0_i32 = arith.constant 0 : i32
    %c0_i32_0 = arith.constant 0 : i32
    %c0_i32_1 = arith.constant 0 : i32
    return %c0_i32, %c0_i32_0 : i32, i32
  }
  func.func @transform_6(%arg0: i32) -> (i32, i32) {
    %c0_i32 = arith.constant 0 : i32
    %c0_i32_0 = arith.constant 0 : i32
    %c0_i32_1 = arith.constant 0 : i32
    return %c0_i32, %c0_i32_0 : i32, i32
  }
  func.func @transform_7(%arg0: i32) -> (i32, i32) {
    %c0_i32 = arith.constant 0 : i32
    %c0_i32_0 = arith.constant 0 : i32
    return %arg0, %c0_i32 : i32, i32
  }
}

</mosaic_0001>

<llo_original>
// kernel: tpu_custom_call.1
$region0: #{tpu_custom_call.1}
  #allocation0 [shape = 'u32[]', space=smem, size = 0x4, offset = 0x4, fixed_abs, tag = 'smem constant byte address 0x4 - core index']
  #allocation1 [shape = 'u32[144,128]{1,0:T(1,128)}', space=vmem, size = 0x12000, scoped, tag = 'internal scratch']
  #allocation2 [shape = 'bf16[16,256]{1,0:T(16,128)(2,1)}', space=vmem, size = 0x2000, scoped, tag = 'scratch operand']
  %s0 = inlined_call_operand.vmem [shape: s32[16,1], index: 0, kind: input, shape index: {}]
  %s1 = inlined_call_operand.vmem [shape: bf16[16,128], index: 1, kind: input, shape index: {}]
  %s2 = inlined_call_operand.hbm [shape: bf16[128,128], index: 2, kind: input, shape index: {}]
  %s3 = inlined_call_operand.hbm [shape: bf16[256,256], index: 3, kind: input, shape index: {}]
  %s4 = inlined_call_operand.vmem [shape: f32[1,256], index: 4, kind: input, shape index: {}]
  %s5 = inlined_call_operand.hbm [shape: bf16[256,128], index: 5, kind: input, shape index: {}]
  %s6 = inlined_call_operand.vmem [shape: f32[1,128], index: 6, kind: input, shape index: {}]
  %s7 = inlined_call_operand.hbm [shape: f32[16,128], index: 7, kind: output, shape index: {}]
  %s8 = sld [smem:[#allocation0]]
  $region50: #{tpu_custom_call.1} parent=0
    _
  %s10 = ssub.s32 1, %s8
  %s11 = scalar_select 0, %s10, %s8
  $region1: #{tpu_custom_call.1} parent=0
    #allocation3 [shape = 'u8[32768]{0}', space=vmem, size = 0x8000, scoped, tag = 'input window, operand 2, single buffered']
    #allocation4 [shape = 's32[1]{0}', space=sflag, size = 0x4, scoped, tag = 'scoped memory for tpu_custom_call.1']
    #allocation5 [shape = 's32[1]{0}', space=sflag, size = 0x4, scoped, tag = 'scoped memory for tpu_custom_call.1']
    #allocation6 [shape = 'u8[131072]{0}', space=vmem, size = 0x20000, scoped, tag = 'input window, operand 3, single buffered']
    #allocation7 [shape = 's32[1]{0}', space=sflag, size = 0x4, scoped, tag = 'scoped memory for tpu_custom_call.1']
    #allocation8 [shape = 'u8[65536]{0}', space=vmem, size = 0x10000, scoped, tag = 'input window, operand 5, single buffered']
    #allocation9 [shape = 'u8[8192]{0}', space=vmem, size = 0x2000, scoped, tag = 'output window, operand 0, single buffered']
    %12 = vsyncpa [#allocation4], 0
    %13 = vsyncpa [#allocation7], 0
    %14 = vsyncpa [#allocation5], 0
    // Predicated region
    $region2: #{tpu_custom_call.1} parent=1 // pred_check
      _
    $region3: #{tpu_custom_call.1} parent=1 // pred_check_branch
      %16 = sbr.rel (0) target = $region5
    $region4: #{tpu_custom_call.1} parent=1 // pred_region
      _
    $region5: #{tpu_custom_call.1} parent=1 // pred_fallthru
      _
    // Predicated region
    $region6: #{tpu_custom_call.1} parent=1 // pred_check
      _
    $region7: #{tpu_custom_call.1} parent=1 // pred_check_branch
      %18 = sbr.rel (0) target = $region9
    $region8: #{tpu_custom_call.1} parent=1 // pred_region
      _
    $region9: #{tpu_custom_call.1} parent=1 // pred_fallthru
      _
    // Predicated region
    $region10: #{tpu_custom_call.1} parent=1 // pred_check
      _
    $region11: #{tpu_custom_call.1} parent=1 // pred_check_branch
      %20 = sbr.rel (0) target = $region13
    $region12: #{tpu_custom_call.1} parent=1 // pred_region
      %s22 = ssub.s32 1024, 1024
      %23 = vsyncadd [#allocation4], %s22
      %s24 = sshll.u32 [#allocation3], 4
      %s25 = int_to_ptr.vmem [resolvable:$true] %s24
      %30 = dma.hbm_to_vmem [thread:$0]  %s2, 1024, %s25, [#allocation4], 64, 64, 4
    $region13: #{tpu_custom_call.1} parent=1 // pred_fallthru
      _
    // Predicated region
    $region14: #{tpu_custom_call.1} parent=1 // pred_check
      _
    $region15: #{tpu_custom_call.1} parent=1 // pred_check_branch
      %32 = sbr.rel (0) target = $region17
    $region16: #{tpu_custom_call.1} parent=1 // pred_region
      %s34 = ssub.s32 4096, 4096
      %35 = vsyncadd [#allocation7], %s34
      %s36 = sshll.u32 [#allocation6], 4
      %s37 = int_to_ptr.vmem [resolvable:$true] %s36
      %42 = dma.hbm_to_vmem [thread:$0]  %s3, 4096, %s37, [#allocation7], 128, 128, 8
    $region17: #{tpu_custom_call.1} parent=1 // pred_fallthru
      _
    // Predicated region
    $region18: #{tpu_custom_call.1} parent=1 // pred_check
      _
    $region19: #{tpu_custom_call.1} parent=1 // pred_check_branch
      %44 = sbr.rel (0) target = $region21
    $region20: #{tpu_custom_call.1} parent=1 // pred_region
      _
    $region21: #{tpu_custom_call.1} parent=1 // pred_fallthru
      _
    // Predicated region
    $region22: #{tpu_custom_call.1} parent=1 // pred_check
      _
    $region23: #{tpu_custom_call.1} parent=1 // pred_check_branch
      %46 = sbr.rel (0) target = $region25
    $region24: #{tpu_custom_call.1} parent=1 // pred_region
      %s48 = ssub.s32 2048, 2048
      %49 = vsyncadd [#allocation7], %s48
      %s50 = sshll.u32 [#allocation8], 4
      %s51 = int_to_ptr.vmem [resolvable:$true] %s50
      %56 = dma.hbm_to_vmem [thread:$0]  %s5, 2048, %s51, [#allocation7], 64, 64, 4
    $region25: #{tpu_custom_call.1} parent=1 // pred_fallthru
      _
    // Predicated region
    $region26: #{tpu_custom_call.1} parent=1 // pred_check
      _
    $region27: #{tpu_custom_call.1} parent=1 // pred_check_branch
      %58 = sbr.rel (0) target = $region29
    $region28: #{tpu_custom_call.1} parent=1 // pred_region
      _
    $region29: #{tpu_custom_call.1} parent=1 // pred_fallthru
      _
    // Predicated region
    $region30: #{tpu_custom_call.1} parent=1 // pred_check
      _
    $region31: #{tpu_custom_call.1} parent=1 // pred_check_branch
      %60 = sbr.rel (0) target = $region33
    $region32: #{tpu_custom_call.1} parent=1 // pred_region
      %61 = dma.done [#allocation4], 1024
    $region33: #{tpu_custom_call.1} parent=1 // pred_fallthru
      _
    // Predicated region
    $region34: #{tpu_custom_call.1} parent=1 // pred_check
      _
    $region35: #{tpu_custom_call.1} parent=1 // pred_check_branch
      %63 = sbr.rel (0) target = $region37
    $region36: #{tpu_custom_call.1} parent=1 // pred_region
      %64 = dma.done [#allocation7], 4096
    $region37: #{tpu_custom_call.1} parent=1 // pred_fallthru
      _
    // Predicated region
    $region38: #{tpu_custom_call.1} parent=1 // pred_check
      _
    $region39: #{tpu_custom_call.1} parent=1 // pred_check_branch
      %66 = sbr.rel (0) target = $region41
    $region40: #{tpu_custom_call.1} parent=1 // pred_region
      %67 = dma.done [#allocation7], 2048
    $region41: #{tpu_custom_call.1} parent=1 // pred_fallthru
      _
    %v69 = vld [vmem:[%s0] sm:$0xff]
    %v70 = vld [vmem:[%s0 + $0x8] sm:$0xff]
    %v71 = vld [vmem:[%s1] sm:$0xf]
    %v72 = vld [vmem:[%s1 + $0x4] sm:$0xf]
    %v73 = vlaneseq
    %v74 = vand.u32 %v73, 127
    %75 = vset.pattern.permute.xlu0 0
    %76 = vperm.xlu0 %75, %v69
    %v77 = vpop.permute.xlu0 %76
    %78 = vset.pattern.permute.xlu0 0
    %79 = vperm.xlu0 %78, %v70
    %v80 = vpop.permute.xlu0 %79
    %vm81 = vcmp.eq.s32.totalorder %v77, %v74
    %vm82 = vcmp.eq.s32.totalorder %v80, %v74
    %v83 = vsel %vm81, 1, 0
    %v84 = vsel %vm82, 1, 0
    %v85 = vcvt.s32.f32 %v83
    %v86 = vcvt.s32.f32 %v84
    %v87 = vpack.c.bf16 %v86, %v85
    %v88 = vld [vmem:[#allocation3] sm:$0xf]
    %v89 = vld [vmem:[#allocation3 + $0x4] sm:$0xf]
    %v90 = vld [vmem:[#allocation3 + $0x8] sm:$0xf]
    %v91 = vld [vmem:[#allocation3 + $0xc] sm:$0xf]
    %v92 = vld [vmem:[#allocation3 + $0x10] sm:$0xf]
    %v93 = vld [vmem:[#allocation3 + $0x14] sm:$0xf]
    %v94 = vld [vmem:[#allocation3 + $0x18] sm:$0xf]
    %v95 = vld [vmem:[#allocation3 + $0x1c] sm:$0xf]
    %v96 = vld [vmem:[#allocation3 + $0x20] sm:$0xf]
    %v97 = vld [vmem:[#allocation3 + $0x24] sm:$0xf]
    %v98 = vld [vmem:[#allocation3 + $0x28] sm:$0xf]
    %v99 = vld [vmem:[#allocation3 + $0x2c] sm:$0xf]
    %v100 = vld [vmem:[#allocation3 + $0x30] sm:$0xf]
    %v101 = vld [vmem:[#allocation3 + $0x34] sm:$0xf]
    %v102 = vld [vmem:[#allocation3 + $0x38] sm:$0xf]
    %v103 = vld [vmem:[#allocation3 + $0x3c] sm:$0xf]
    %v120 = vunpack.c.l.b16 %v88
    %v121 = vunpack.c.l.b16 %v89
    %v122 = vunpack.c.l.b16 %v90
    %v123 = vunpack.c.l.b16 %v91
    %v124 = vunpack.c.l.b16 %v92
    %v125 = vunpack.c.l.b16 %v93
    %v126 = vunpack.c.l.b16 %v94
    %v127 = vunpack.c.l.b16 %v95
    %v128 = vunpack.c.l.b16 %v96
    %v129 = vunpack.c.l.b16 %v97
    %v130 = vunpack.c.l.b16 %v98
    %v131 = vunpack.c.l.b16 %v99
    %v132 = vunpack.c.l.b16 %v100
    %v133 = vunpack.c.l.b16 %v101
    %v134 = vunpack.c.l.b16 %v102
    %v135 = vunpack.c.l.b16 %v103
    %v136 = vpack.c.b16 %v121, %v120
    %v137 = vpack.c.b16 %v123, %v122
    %v138 = vpack.c.b16 %v125, %v124
    %v139 = vpack.c.b16 %v127, %v126
    %v140 = vpack.c.b16 %v129, %v128
    %v141 = vpack.c.b16 %v131, %v130
    %v142 = vpack.c.b16 %v133, %v132
    %v143 = vpack.c.b16 %v135, %v134
    %152 = vmatprep.subr.bf16.mxu0 0
    %153 = vmatpush1.bf16.msra.mxu0 %v136
    %154 = vmatprep.subr.bf16.mxu0 0
    %155 = vmatpush1.bf16.msra.mxu0 %v137
    %156 = vmatprep.subr.bf16.mxu0 0
    %157 = vmatpush1.bf16.msra.mxu0 %v138
    %158 = vmatprep.subr.bf16.mxu0 0
    %159 = vmatpush1.bf16.msra.mxu0 %v139
    %160 = vmatprep.subr.bf16.mxu0 0
    %161 = vmatpush1.bf16.msra.mxu0 %v140
    %162 = vmatprep.subr.bf16.mxu0 0
    %163 = vmatpush1.bf16.msra.mxu0 %v141
    %164 = vmatprep.subr.bf16.mxu0 0
    %165 = vmatpush1.bf16.msra.mxu0 %v142
    %166 = vmatprep.subr.bf16.mxu0 0
    %167 = vmatpush1.bf16.msra.mxu0 %v143
    %168 = vmatprep.subr.bf16.mxu0 0
    %169 = vmatpush1.bf16.msra.mxu0 0
    %170 = vmatprep.subr.bf16.mxu0 0
    %171 = vmatpush1.bf16.msra.mxu0 0
    %172 = vmatprep.subr.bf16.mxu0 0
    %173 = vmatpush1.bf16.msra.mxu0 0
    %174 = vmatprep.subr.bf16.mxu0 0
    %175 = vmatpush1.bf16.msra.mxu0 0
    %176 = vmatprep.subr.bf16.mxu0 0
    %177 = vmatpush1.bf16.msra.mxu0 0
    %178 = vmatprep.subr.bf16.mxu0 0
    %179 = vmatpush1.bf16.msra.mxu0 0
    %180 = vmatprep.subr.bf16.mxu0 0
    %181 = vmatpush1.bf16.msra.mxu0 0
    %182 = vmatprep.subr.bf16.mxu0 0
    %183 = vmatpush1.bf16.msra.mxu0 0
    %184 = vmatprep.mubr.bf16.mxu0 0
    %185 = vmatmul.mubr.bf16.gmra.mrb[0].mxu0 %v87
    %v186 = vpop.f32.mrb[0].mxu0
    %v187 = vadd.f32 0.0, %v186
    %v188 = vpop.f32.mrb[0].mxu0
    %v189 = vpop.f32.mrb[0].mxu0
    %v190 = vadd.f32 0.0, %v189
    %v191 = vpop.f32.mrb[0].mxu0
    %192 = vdwg.mxu0
    %v195 = vunpack.c.l.b16 %v71
    %v196 = vunpack.c.l.b16 %v72
    %v197 = vpack.c.b16 %v196, %v195
    %199 = vst [vmem:[#allocation2] sm:$0xff] %v197
    %v200 = vpack.c.bf16 %v190, %v187
    %201 = vst [vmem:[#allocation2 + $0x8] sm:$0xff] %v200
    %v202 = vld [vmem:[#allocation2] sm:$0xff]
    %v203 = vld [vmem:[#allocation2 + $0x8] sm:$0xff]
    %v204 = vld [vmem:[#allocation6] sm:$0xff]
    %v205 = vld [vmem:[#allocation6 + $0x8] sm:$0xff]
    %v206 = vld [vmem:[#allocation6 + $0x10] sm:$0xff]
    %v207 = vld [vmem:[#allocation6 + $0x18] sm:$0xff]
    %v208 = vld [vmem:[#allocation6 + $0x20] sm:$0xff]
    %v209 = vld [vmem:[#allocation6 + $0x28] sm:$0xff]
    %v210 = vld [vmem:[#allocation6 + $0x30] sm:$0xff]
    %v211 = vld [vmem:[#allocation6 + $0x38] sm:$0xff]
    %v212 = vld [vmem:[#allocation6 + $0x40] sm:$0xff]
    %v213 = vld [vmem:[#allocation6 + $0x48] sm:$0xff]
    %v214 = vld [vmem:[#allocation6 + $0x50] sm:$0xff]
    %v215 = vld [vmem:[#allocation6 + $0x58] sm:$0xff]
    %v216 = vld [vmem:[#allocation6 + $0x60] sm:$0xff]
    %v217 = vld [vmem:[#allocation6 + $0x68] sm:$0xff]
    %v218 = vld [vmem:[#allocation6 + $0x70] sm:$0xff]
    %v219 = vld [vmem:[#allocation6 + $0x78] sm:$0xff]
    %v220 = vld [vmem:[#allocation6 + $0x80] sm:$0xff]
    %v221 = vld [vmem:[#allocation6 + $0x88] sm:$0xff]
    %v222 = vld [vmem:[#allocation6 + $0x90] sm:$0xff]
    %v223 = vld [vmem:[#allocation6 + $0x98] sm:$0xff]
    %v224 = vld [vmem:[#allocation6 + $0xa0] sm:$0xff]
    %v225 = vld [vmem:[#allocation6 + $0xa8] sm:$0xff]
    %v226 = vld [vmem:[#allocation6 + $0xb0] sm:$0xff]
    %v227 = vld [vmem:[#allocation6 + $0xb8] sm:$0xff]
    %v228 = vld [vmem:[#allocation6 + $0xc0] sm:$0xff]
    %v229 = vld [vmem:[#allocation6 + $0xc8] sm:$0xff]
    %v230 = vld [vmem:[#allocation6 + $0xd0] sm:$0xff]
    %v231 = vld [vmem:[#allocation6 + $0xd8] sm:$0xff]
    %v232 = vld [vmem:[#allocation6 + $0xe0] sm:$0xff]
    %v233 = vld [vmem:[#allocation6 + $0xe8] sm:$0xff]
    %v234 = vld [vmem:[#allocation6 + $0xf0] sm:$0xff]
    %v235 = vld [vmem:[#allocation6 + $0xf8] sm:$0xff]
    %v236 = vld [vmem:[%s4] sm:$0x3]
    %v238 = vlaneseq
    %v239 = vshrl.u32 %v238, 7
    %v240 = vsub.s32 0, %v239
    %v241 = vrot.slane %v236, %v240
    %v242 = vlaneseq
    %v243 = vshrl.u32 %v242, 7
    %v244 = vsub.s32 1, %v243
    %v245 = vrot.slane %v236, %v244
    %v280 = vunpack.c.l.b16 %v204
    %v281 = vunpack.c.h.b16 %v204
    %v282 = vunpack.c.l.b16 %v205
    %v283 = vunpack.c.h.b16 %v205
    %v284 = vunpack.c.l.b16 %v206
    %v285 = vunpack.c.h.b16 %v206
    %v286 = vunpack.c.l.b16 %v207
    %v287 = vunpack.c.h.b16 %v207
    %v288 = vunpack.c.l.b16 %v208
    %v289 = vunpack.c.h.b16 %v208
    %v290 = vunpack.c.l.b16 %v209
    %v291 = vunpack.c.h.b16 %v209
    %v292 = vunpack.c.l.b16 %v210
    %v293 = vunpack.c.h.b16 %v210
    %v294 = vunpack.c.l.b16 %v211
    %v295 = vunpack.c.h.b16 %v211
    %v296 = vunpack.c.l.b16 %v212
    %v297 = vunpack.c.h.b16 %v212
    %v298 = vunpack.c.l.b16 %v213
    %v299 = vunpack.c.h.b16 %v213
    %v300 = vunpack.c.l.b16 %v214
    %v301 = vunpack.c.h.b16 %v214
    %v302 = vunpack.c.l.b16 %v215
    %v303 = vunpack.c.h.b16 %v215
    %v304 = vunpack.c.l.b16 %v216
    %v305 = vunpack.c.h.b16 %v216
    %v306 = vunpack.c.l.b16 %v217
    %v307 = vunpack.c.h.b16 %v217
    %v308 = vunpack.c.l.b16 %v218
    %v309 = vunpack.c.h.b16 %v218
    %v310 = vunpack.c.l.b16 %v219
    %v311 = vunpack.c.h.b16 %v219
    %v312 = vunpack.c.l.b16 %v220
    %v313 = vunpack.c.h.b16 %v220
    %v314 = vunpack.c.l.b16 %v221
    %v315 = vunpack.c.h.b16 %v221
    %v316 = vunpack.c.l.b16 %v222
    %v317 = vunpack.c.h.b16 %v222
    %v318 = vunpack.c.l.b16 %v223
    %v319 = vunpack.c.h.b16 %v223
    %v320 = vunpack.c.l.b16 %v224
    %v321 = vunpack.c.h.b16 %v224
    %v322 = vunpack.c.l.b16 %v225
    %v323 = vunpack.c.h.b16 %v225
    %v324 = vunpack.c.l.b16 %v226
    %v325 = vunpack.c.h.b16 %v226
    %v326 = vunpack.c.l.b16 %v227
    %v327 = vunpack.c.h.b16 %v227
    %v328 = vunpack.c.l.b16 %v228
    %v329 = vunpack.c.h.b16 %v228
    %v330 = vunpack.c.l.b16 %v229
    %v331 = vunpack.c.h.b16 %v229
    %v332 = vunpack.c.l.b16 %v230
    %v333 = vunpack.c.h.b16 %v230
    %v334 = vunpack.c.l.b16 %v231
    %v335 = vunpack.c.h.b16 %v231
    %v336 = vunpack.c.l.b16 %v232
    %v337 = vunpack.c.h.b16 %v232
    %v338 = vunpack.c.l.b16 %v233
    %v339 = vunpack.c.h.b16 %v233
    %v340 = vunpack.c.l.b16 %v234
    %v341 = vunpack.c.h.b16 %v234
    %v342 = vunpack.c.l.b16 %v235
    %v343 = vunpack.c.h.b16 %v235
    %v344 = vpack.c.b16 %v282, %v280
    %v345 = vpack.c.b16 %v283, %v281
    %v346 = vpack.c.b16 %v286, %v284
    %v347 = vpack.c.b16 %v287, %v285
    %v348 = vpack.c.b16 %v290, %v288
    %v349 = vpack.c.b16 %v291, %v289
    %v350 = vpack.c.b16 %v294, %v292
    %v351 = vpack.c.b16 %v295, %v293
    %v352 = vpack.c.b16 %v298, %v296
    %v353 = vpack.c.b16 %v299, %v297
    %v354 = vpack.c.b16 %v302, %v300
    %v355 = vpack.c.b16 %v303, %v301
    %v356 = vpack.c.b16 %v306, %v304
    %v357 = vpack.c.b16 %v307, %v305
    %v358 = vpack.c.b16 %v310, %v308
    %v359 = vpack.c.b16 %v311, %v309
    %v360 = vpack.c.b16 %v314, %v312
    %v361 = vpack.c.b16 %v315, %v313
    %v362 = vpack.c.b16 %v318, %v316
    %v363 = vpack.c.b16 %v319, %v317
    %v364 = vpack.c.b16 %v322, %v320
    %v365 = vpack.c.b16 %v323, %v321
    %v366 = vpack.c.b16 %v326, %v324
    %v367 = vpack.c.b16 %v327, %v325
    %v368 = vpack.c.b16 %v330, %v328
    %v369 = vpack.c.b16 %v331, %v329
    %v370 = vpack.c.b16 %v334, %v332
    %v371 = vpack.c.b16 %v335, %v333
    %v372 = vpack.c.b16 %v338, %v336
    %v373 = vpack.c.b16 %v339, %v337
    %v374 = vpack.c.b16 %v342, %v340
    %v375 = vpack.c.b16 %v343, %v341
    %408 = vmatprep.subr.bf16.mxu0 %v345
    %409 = vmatpush1.bf16.msra.mxu0 %v344
    %410 = vmatprep.subr.bf16.mxu0 %v347
    %411 = vmatpush1.bf16.msra.mxu0 %v346
    %412 = vmatprep.subr.bf16.mxu0 %v349
    %413 = vmatpush1.bf16.msra.mxu0 %v348
    %414 = vmatprep.subr.bf16.mxu0 %v351
    %415 = vmatpush1.bf16.msra.mxu0 %v350
    %416 = vmatprep.subr.bf16.mxu0 %v353
    %417 = vmatpush1.bf16.msra.mxu0 %v352
    %418 = vmatprep.subr.bf16.mxu0 %v355
    %419 = vmatpush1.bf16.msra.mxu0 %v354
    %420 = vmatprep.subr.bf16.mxu0 %v357
    %421 = vmatpush1.bf16.msra.mxu0 %v356
    %422 = vmatprep.subr.bf16.mxu0 %v359
    %423 = vmatpush1.bf16.msra.mxu0 %v358
    %424 = vmatprep.subr.bf16.mxu0 %v361
    %425 = vmatpush1.bf16.msra.mxu0 %v360
    %426 = vmatprep.subr.bf16.mxu0 %v363
    %427 = vmatpush1.bf16.msra.mxu0 %v362
    %428 = vmatprep.subr.bf16.mxu0 %v365
    %429 = vmatpush1.bf16.msra.mxu0 %v364
    %430 = vmatprep.subr.bf16.mxu0 %v367
    %431 = vmatpush1.bf16.msra.mxu0 %v366
    %432 = vmatprep.subr.bf16.mxu0 %v369
    %433 = vmatpush1.bf16.msra.mxu0 %v368
    %434 = vmatprep.subr.bf16.mxu0 %v371
    %435 = vmatpush1.bf16.msra.mxu0 %v370
    %436 = vmatprep.subr.bf16.mxu0 %v373
    %437 = vmatpush1.bf16.msra.mxu0 %v372
    %438 = vmatprep.subr.bf16.mxu0 %v375
    %439 = vmatpush1.bf16.msra.mxu0 %v374
    %440 = vmatprep.mubr.bf16.mxu0 %v203
    %441 = vmatmul.mubr.bf16.gmra.mrb[0].mxu0 %v202
    %v442 = vpop.f32.mrb[0].mxu0
    %v443 = vadd.f32 %v241, %v442
    %v444 = vpop.f32.mrb[0].mxu0
    %v445 = vadd.f32 %v245, %v444
    %v446 = vpop.f32.mrb[0].mxu0
    %v447 = vadd.f32 %v241, %v446
    %v448 = vpop.f32.mrb[0].mxu0
    %v449 = vadd.f32 %v245, %v448
    %450 = vdwg.mxu0
    %v451 = vmax.f32 %v443, 0.0
    %v452 = vmax.f32 %v445, 0.0
    %v453 = vmax.f32 %v447, 0.0
    %v454 = vmax.f32 %v449, 0.0
    %v455 = vunpack.c.l.bf16 %v202
    %v456 = vunpack.c.l.bf16 %v203
    %v457 = vunpack.c.h.bf16 %v202
    %v458 = vunpack.c.h.bf16 %v203
    %v459 = vadd.f32 %v451, %v455
    %v460 = vadd.f32 %v452, %v456
    %v461 = vadd.f32 %v453, %v457
    %v462 = vadd.f32 %v454, %v458
    %v463 = vpack.c.bf16 %v461, %v459
    %v464 = vpack.c.bf16 %v462, %v460
    %v465 = vld [vmem:[#allocation8] sm:$0xf]
    %v466 = vld [vmem:[#allocation8 + $0x4] sm:$0xf]
    %v467 = vld [vmem:[#allocation8 + $0x8] sm:$0xf]
    %v468 = vld [vmem:[#allocation8 + $0xc] sm:$0xf]
    %v469 = vld [vmem:[#allocation8 + $0x10] sm:$0xf]
    %v470 = vld [vmem:[#allocation8 + $0x14] sm:$0xf]
    %v471 = vld [vmem:[#allocation8 + $0x18] sm:$0xf]
    %v472 = vld [vmem:[#allocation8 + $0x1c] sm:$0xf]
    %v473 = vld [vmem:[#allocation8 + $0x20] sm:$0xf]
    %v474 = vld [vmem:[#allocation8 + $0x24] sm:$0xf]
    %v475 = vld [vmem:[#allocation8 + $0x28] sm:$0xf]
    %v476 = vld [vmem:[#allocation8 + $0x2c] sm:$0xf]
    %v477 = vld [vmem:[#allocation8 + $0x30] sm:$0xf]
    %v478 = vld [vmem:[#allocation8 + $0x34] sm:$0xf]
    %v479 = vld [vmem:[#allocation8 + $0x38] sm:$0xf]
    %v480 = vld [vmem:[#allocation8 + $0x3c] sm:$0xf]
    %v481 = vld [vmem:[#allocation8 + $0x40] sm:$0xf]
    %v482 = vld [vmem:[#allocation8 + $0x44] sm:$0xf]
    %v483 = vld [vmem:[#allocation8 + $0x48] sm:$0xf]
    %v484 = vld [vmem:[#allocation8 + $0x4c] sm:$0xf]
    %v485 = vld [vmem:[#allocation8 + $0x50] sm:$0xf]
    %v486 = vld [vmem:[#allocation8 + $0x54] sm:$0xf]
    %v487 = vld [vmem:[#allocation8 + $0x58] sm:$0xf]
    %v488 = vld [vmem:[#allocation8 + $0x5c] sm:$0xf]
    %v489 = vld [vmem:[#allocation8 + $0x60] sm:$0xf]
    %v490 = vld [vmem:[#allocation8 + $0x64] sm:$0xf]
    %v491 = vld [vmem:[#allocation8 + $0x68] sm:$0xf]
    %v492 = vld [vmem:[#allocation8 + $0x6c] sm:$0xf]
    %v493 = vld [vmem:[#allocation8 + $0x70] sm:$0xf]
    %v494 = vld [vmem:[#allocation8 + $0x74] sm:$0xf]
    %v495 = vld [vmem:[#allocation8 + $0x78] sm:$0xf]
    %v496 = vld [vmem:[#allocation8 + $0x7c] sm:$0xf]
    %v497 = vld [vmem:[%s6] sm:$0x1]
    %v499 = vlaneseq
    %v500 = vshrl.u32 %v499, 7
    %v501 = vsub.s32 0, %v500
    %v502 = vrot.slane %v497, %v501
    %v536 = vunpack.c.l.b16 %v465
    %v537 = vunpack.c.l.b16 %v466
    %v538 = vunpack.c.l.b16 %v467
    %v539 = vunpack.c.l.b16 %v468
    %v540 = vunpack.c.l.b16 %v469
    %v541 = vunpack.c.l.b16 %v470
    %v542 = vunpack.c.l.b16 %v471
    %v543 = vunpack.c.l.b16 %v472
    %v544 = vunpack.c.l.b16 %v473
    %v545 = vunpack.c.l.b16 %v474
    %v546 = vunpack.c.l.b16 %v475
    %v547 = vunpack.c.l.b16 %v476
    %v548 = vunpack.c.l.b16 %v477
    %v549 = vunpack.c.l.b16 %v478
    %v550 = vunpack.c.l.b16 %v479
    %v551 = vunpack.c.l.b16 %v480
    %v552 = vunpack.c.l.b16 %v481
    %v553 = vunpack.c.l.b16 %v482
    %v554 = vunpack.c.l.b16 %v483
    %v555 = vunpack.c.l.b16 %v484
    %v556 = vunpack.c.l.b16 %v485
    %v557 = vunpack.c.l.b16 %v486
    %v558 = vunpack.c.l.b16 %v487
    %v559 = vunpack.c.l.b16 %v488
    %v560 = vunpack.c.l.b16 %v489
    %v561 = vunpack.c.l.b16 %v490
    %v562 = vunpack.c.l.b16 %v491
    %v563 = vunpack.c.l.b16 %v492
    %v564 = vunpack.c.l.b16 %v493
    %v565 = vunpack.c.l.b16 %v494
    %v566 = vunpack.c.l.b16 %v495
    %v567 = vunpack.c.l.b16 %v496
    %v568 = vpack.c.b16 %v537, %v536
    %v569 = vpack.c.b16 %v539, %v538
    %v570 = vpack.c.b16 %v541, %v540
    %v571 = vpack.c.b16 %v543, %v542
    %v572 = vpack.c.b16 %v545, %v544
    %v573 = vpack.c.b16 %v547, %v546
    %v574 = vpack.c.b16 %v549, %v548
    %v575 = vpack.c.b16 %v551, %v550
    %v576 = vpack.c.b16 %v553, %v552
    %v577 = vpack.c.b16 %v555, %v554
    %v578 = vpack.c.b16 %v557, %v556
    %v579 = vpack.c.b16 %v559, %v558
    %v580 = vpack.c.b16 %v561, %v560
    %v581 = vpack.c.b16 %v563, %v562
    %v582 = vpack.c.b16 %v565, %v564
    %v583 = vpack.c.b16 %v567, %v566
    %600 = vmatprep.subr.bf16.mxu0 0
    %601 = vmatpush1.bf16.msra.mxu0 %v568
    %602 = vmatprep.subr.bf16.mxu0 0
    %603 = vmatpush1.bf16.msra.mxu0 %v569
    %604 = vmatprep.subr.bf16.mxu0 0
    %605 = vmatpush1.bf16.msra.mxu0 %v570
    %606 = vmatprep.subr.bf16.mxu0 0
    %607 = vmatpush1.bf16.msra.mxu0 %v571
    %608 = vmatprep.subr.bf16.mxu0 0
    %609 = vmatpush1.bf16.msra.mxu0 %v572
    %610 = vmatprep.subr.bf16.mxu0 0
    %611 = vmatpush1.bf16.msra.mxu0 %v573
    %612 = vmatprep.subr.bf16.mxu0 0
    %613 = vmatpush1.bf16.msra.mxu0 %v574
    %614 = vmatprep.subr.bf16.mxu0 0
    %615 = vmatpush1.bf16.msra.mxu0 %v575
    %616 = vmatprep.subr.bf16.mxu0 0
    %617 = vmatpush1.bf16.msra.mxu0 %v576
    %618 = vmatprep.subr.bf16.mxu0 0
    %619 = vmatpush1.bf16.msra.mxu0 %v577
    %620 = vmatprep.subr.bf16.mxu0 0
    %621 = vmatpush1.bf16.msra.mxu0 %v578
    %622 = vmatprep.subr.bf16.mxu0 0
    %623 = vmatpush1.bf16.msra.mxu0 %v579
    %624 = vmatprep.subr.bf16.mxu0 0
    %625 = vmatpush1.bf16.msra.mxu0 %v580
    %626 = vmatprep.subr.bf16.mxu0 0
    %627 = vmatpush1.bf16.msra.mxu0 %v581
    %628 = vmatprep.subr.bf16.mxu0 0
    %629 = vmatpush1.bf16.msra.mxu0 %v582
    %630 = vmatprep.subr.bf16.mxu0 0
    %631 = vmatpush1.bf16.msra.mxu0 %v583
    %632 = vmatprep.mubr.bf16.mxu0 %v464
    %633 = vmatmul.mubr.bf16.gmra.mrb[0].mxu0 %v463
    %v634 = vpop.f32.mrb[0].mxu0
    %v635 = vadd.f32 %v502, %v634
    %v636 = vpop.f32.mrb[0].mxu0
    %v637 = vpop.f32.mrb[0].mxu0
    %v638 = vadd.f32 %v502, %v637
    %v639 = vpop.f32.mrb[0].mxu0
    %640 = vdwg.mxu0
    %641 = vst [vmem:[#allocation9] sm:$0xff] %v635
    %642 = vst [vmem:[#allocation9 + $0x8] sm:$0xff] %v638
    // Predicated region
    $region42: #{tpu_custom_call.1} parent=1 // pred_check
      _
    $region43: #{tpu_custom_call.1} parent=1 // pred_check_branch
      %644 = sbr.rel (0) target = $region45
    $region44: #{tpu_custom_call.1} parent=1 // pred_region
      %s646 = ssub.s32 256, 256
      %647 = vsyncadd [#allocation5], %s646
      %s648 = sshll.u32 [#allocation9], 4
      %s649 = int_to_ptr.vmem [resolvable:$true] %s648
      %654 = dma.vmem_to_hbm [thread:$0]  %s649, 256, %s7, [#allocation5], 128, 128, 8
    $region45: #{tpu_custom_call.1} parent=1 // pred_fallthru
      _
    // Predicated region
    $region46: #{tpu_custom_call.1} parent=1 // pred_check
      _
    $region47: #{tpu_custom_call.1} parent=1 // pred_check_branch
      %656 = sbr.rel (0) target = $region49
    $region48: #{tpu_custom_call.1} parent=1 // pred_region
      %657 = dma.done [#allocation5], 256
    $region49: #{tpu_custom_call.1} parent=1 // pred_fallthru
      _
    %658 = vsyncpa [#allocation4], 1
    %659 = vsyncpa [#allocation7], 1
    %660 = vsyncpa [#allocation5], 1

// kernel: tpu_custom_call.1
$region0: #{tpu_custom_call.1}
  #allocation0 [shape = 'u32[]', space=smem, size = 0x4, offset = 0x4, fixed_abs, tag = 'smem constant byte address 0x4 - core index']
  #allocation1 [shape = 'u32[144,128]{1,0:T(1,128)}', space=vmem, size = 0x12000, scoped, tag = 'internal scratch']
  #allocation2 [shape = 'bf16[16,256]{1,0:T(16,128)(2,1)}', space=vmem, size = 0x2000, scoped, tag = 'scratch operand']
  %s0 = inlined_call_operand.vmem [shape: s32[16,1], index: 0, kind: input, shape index: {}]
  %s1 = inlined_call_operand.vmem [shape: bf16[16,128], index: 1, kind: input, shape index: {}]
  %s2 = inlined_call_operand.hbm [shape: bf16[128,128], index: 2, kind: input, shape index: {}]
  %s3 = inlined_call_operand.hbm [shape: bf16[256,256], index: 3, kind: input, shape index: {}]
  %s4 = inlined_call_operand.vmem [shape: f32[1,256], index: 4, kind: input, shape index: {}]
  %s5 = inlined_call_operand.hbm [shape: bf16[256,128], index: 5, kind: input, shape index: {}]
  %s6 = inlined_call_operand.vmem [shape: f32[1,128], index: 6, kind: input, shape index: {}]
  %s7 = inlined_call_operand.hbm [shape: f32[16,128], index: 7, kind: output, shape index: {}]
  %s8 = sld [smem:[#allocation0]]
  $region50: #{tpu_custom_call.1} parent=0
    _
  %s10 = ssub.s32 1, %s8
  %s11 = scalar_select 0, %s10, %s8
  $region1: #{tpu_custom_call.1} parent=0
    #allocation3 [shape = 'u8[32768]{0}', space=vmem, size = 0x8000, scoped, tag = 'input window, operand 2, single buffered']
    #allocation4 [shape = 's32[1]{0}', space=sflag, size = 0x4, scoped, tag = 'scoped memory for tpu_custom_call.1']
    #allocation5 [shape = 's32[1]{0}', space=sflag, size = 0x4, scoped, tag = 'scoped memory for tpu_custom_call.1']
    #allocation6 [shape = 'u8[131072]{0}', space=vmem, size = 0x20000, scoped, tag = 'input window, operand 3, single buffered']
    #allocation7 [shape = 's32[1]{0}', space=sflag, size = 0x4, scoped, tag = 'scoped memory for tpu_custom_call.1']
    #allocation8 [shape = 'u8[65536]{0}', space=vmem, size = 0x10000, scoped, tag = 'input window, operand 5, single buffered']
    #allocation9 [shape = 'u8[8192]{0}', space=vmem, size = 0x2000, scoped, tag = 'output window, operand 0, single buffered']
    %12 = vsyncpa [#allocation4], 0
    %13 = vsyncpa [#allocation7], 0
    %14 = vsyncpa [#allocation5], 0
    // Predicated region
    $region2: #{tpu_custom_call.1} parent=1 // pred_check
      _
    $region3: #{tpu_custom_call.1} parent=1 // pred_check_branch
      %16 = sbr.rel (0) target = $region5
    $region4: #{tpu_custom_call.1} parent=1 // pred_region
      _
    $region5: #{tpu_custom_call.1} parent=1 // pred_fallthru
      _
    // Predicated region
    $region6: #{tpu_custom_call.1} parent=1 // pred_check
      _
    $region7: #{tpu_custom_call.1} parent=1 // pred_check_branch
      %18 = sbr.rel (0) target = $region9
    $region8: #{tpu_custom_call.1} parent=1 // pred_region
      _
    $region9: #{tpu_custom_call.1} parent=1 // pred_fallthru
      _
    // Predicated region
    $region10: #{tpu_custom_call.1} parent=1 // pred_check
      _
    $region11: #{tpu_custom_call.1} parent=1 // pred_check_branch
      %20 = sbr.rel (0) target = $region13
    $region12: #{tpu_custom_call.1} parent=1 // pred_region
      %s22 = ssub.s32 1024, 1024
      %23 = vsyncadd [#allocation4], %s22
      %s24 = sshll.u32 [#allocation3], 4
      %s25 = int_to_ptr.vmem [resolvable:$true] %s24
      %30 = dma.hbm_to_vmem [thread:$0]  %s2, 1024, %s25, [#allocation4], 64, 64, 4
    $region13: #{tpu_custom_call.1} parent=1 // pred_fallthru
      _
    // Predicated region
    $region14: #{tpu_custom_call.1} parent=1 // pred_check
      _
    $region15: #{tpu_custom_call.1} parent=1 // pred_check_branch
      %32 = sbr.rel (0) target = $region17
    $region16: #{tpu_custom_call.1} parent=1 // pred_region
      %s34 = ssub.s32 4096, 4096
      %35 = vsyncadd [#allocation7], %s34
      %s36 = sshll.u32 [#allocation6], 4
      %s37 = int_to_ptr.vmem [resolvable:$true] %s36
      %42 = dma.hbm_to_vmem [thread:$0]  %s3, 4096, %s37, [#allocation7], 128, 128, 8
    $region17: #{tpu_custom_call.1} parent=1 // pred_fallthru
      _
    // Predicated region
    $region18: #{tpu_custom_call.1} parent=1 // pred_check
      _
    $region19: #{tpu_custom_call.1} parent=1 // pred_check_branch
      %44 = sbr.rel (0) target = $region21
    $region20: #{tpu_custom_call.1} parent=1 // pred_region
      _
    $region21: #{tpu_custom_call.1} parent=1 // pred_fallthru
      _
    // Predicated region
    $region22: #{tpu_custom_call.1} parent=1 // pred_check
      _
    $region23: #{tpu_custom_call.1} parent=1 // pred_check_branch
      %46 = sbr.rel (0) target = $region25
    $region24: #{tpu_custom_call.1} parent=1 // pred_region
      %s48 = ssub.s32 2048, 2048
      %49 = vsyncadd [#allocation7], %s48
      %s50 = sshll.u32 [#allocation8], 4
      %s51 = int_to_ptr.vmem [resolvable:$true] %s50
      %56 = dma.hbm_to_vmem [thread:$0]  %s5, 2048, %s51, [#allocation7], 64, 64, 4
    $region25: #{tpu_custom_call.1} parent=1 // pred_fallthru
      _
    // Predicated region
    $region26: #{tpu_custom_call.1} parent=1 // pred_check
      _
    $region27: #{tpu_custom_call.1} parent=1 // pred_check_branch
      %58 = sbr.rel (0) target = $region29
    $region28: #{tpu_custom_call.1} parent=1 // pred_region
      _
    $region29: #{tpu_custom_call.1} parent=1 // pred_fallthru
      _
    // Predicated region
    $region30: #{tpu_custom_call.1} parent=1 // pred_check
      _
    $region31: #{tpu_custom_call.1} parent=1 // pred_check_branch
      %60 = sbr.rel (0) target = $region33
    $region32: #{tpu_custom_call.1} parent=1 // pred_region
      %61 = dma.done [#allocation4], 1024
    $region33: #{tpu_custom_call.1} parent=1 // pred_fallthru
      _
    // Predicated region
    $region34: #{tpu_custom_call.1} parent=1 // pred_check
      _
    $region35: #{tpu_custom_call.1} parent=1 // pred_check_branch
      %63 = sbr.rel (0) target = $region37
    $region36: #{tpu_custom_call.1} parent=1 // pred_region
      %64 = dma.done [#allocation7], 4096
    $region37: #{tpu_custom_call.1} parent=1 // pred_fallthru
      _
    // Predicated region
    $region38: #{tpu_custom_call.1} parent=1 // pred_check
      _
    $region39: #{tpu_custom_call.1} parent=1 // pred_check_branch
      %66 = sbr.rel (0) target = $region41
    $region40: #{tpu_custom_call.1} parent=1 // pred_region
      %67 = dma.done [#allocation7], 2048
    $region41: #{tpu_custom_call.1} parent=1 // pred_fallthru
      _
    %v69 = vld [vmem:[%s0] sm:$0xff]
    %v70 = vld [vmem:[%s0 + $0x8] sm:$0xff]
    %v71 = vld [vmem:[%s1] sm:$0xf]
    %v72 = vld [vmem:[%s1 + $0x4] sm:$0xf]
    %v73 = vlaneseq
    %v74 = vand.u32 %v73, 127
    %75 = vset.pattern.permute.xlu0 0
    %76 = vperm.xlu0 %75, %v69
    %v77 = vpop.permute.xlu0 %76
    %78 = vset.pattern.permute.xlu0 0
    %79 = vperm.xlu0 %78, %v70
    %v80 = vpop.permute.xlu0 %79
    %vm81 = vcmp.eq.s32.totalorder %v77, %v74
    %vm82 = vcmp.eq.s32.totalorder %v80, %v74
    %v83 = vsel %vm81, 1, 0
    %v84 = vsel %vm82, 1, 0
    %v85 = vcvt.s32.f32 %v83
    %v86 = vcvt.s32.f32 %v84
    %v87 = vpack.c.bf16 %v86, %v85
    %v88 = vld [vmem:[#allocation3] sm:$0xf]
    %v89 = vld [vmem:[#allocation3 + $0x4] sm:$0xf]
    %v90 = vld [vmem:[#allocation3 + $0x8] sm:$0xf]
    %v91 = vld [vmem:[#allocation3 + $0xc] sm:$0xf]
    %v92 = vld [vmem:[#allocation3 + $0x10] sm:$0xf]
    %v93 = vld [vmem:[#allocation3 + $0x14] sm:$0xf]
    %v94 = vld [vmem:[#allocation3 + $0x18] sm:$0xf]
    %v95 = vld [vmem:[#allocation3 + $0x1c] sm:$0xf]
    %v96 = vld [vmem:[#allocation3 + $0x20] sm:$0xf]
    %v97 = vld [vmem:[#allocation3 + $0x24] sm:$0xf]
    %v98 = vld [vmem:[#allocation3 + $0x28] sm:$0xf]
    %v99 = vld [vmem:[#allocation3 + $0x2c] sm:$0xf]
    %v100 = vld [vmem:[#allocation3 + $0x30] sm:$0xf]
    %v101 = vld [vmem:[#allocation3 + $0x34] sm:$0xf]
    %v102 = vld [vmem:[#allocation3 + $0x38] sm:$0xf]
    %v103 = vld [vmem:[#allocation3 + $0x3c] sm:$0xf]
    %v120 = vunpack.c.l.b16 %v88
    %v121 = vunpack.c.l.b16 %v89
    %v122 = vunpack.c.l.b16 %v90
    %v123 = vunpack.c.l.b16 %v91
    %v124 = vunpack.c.l.b16 %v92
    %v125 = vunpack.c.l.b16 %v93
    %v126 = vunpack.c.l.b16 %v94
    %v127 = vunpack.c.l.b16 %v95
    %v128 = vunpack.c.l.b16 %v96
    %v129 = vunpack.c.l.b16 %v97
    %v130 = vunpack.c.l.b16 %v98
    %v131 = vunpack.c.l.b16 %v99
    %v132 = vunpack.c.l.b16 %v100
    %v133 = vunpack.c.l.b16 %v101
    %v134 = vunpack.c.l.b16 %v102
    %v135 = vunpack.c.l.b16 %v103
    %v136 = vpack.c.b16 %v121, %v120
    %v137 = vpack.c.b16 %v123, %v122
    %v138 = vpack.c.b16 %v125, %v124
    %v139 = vpack.c.b16 %v127, %v126
    %v140 = vpack.c.b16 %v129, %v128
    %v141 = vpack.c.b16 %v131, %v130
    %v142 = vpack.c.b16 %v133, %v132
    %v143 = vpack.c.b16 %v135, %v134
    %152 = vmatprep.subr.bf16.mxu0 0
    %153 = vmatpush1.bf16.msra.mxu0 %v136
    %154 = vmatprep.subr.bf16.mxu0 0
    %155 = vmatpush1.bf16.msra.mxu0 %v137
    %156 = vmatprep.subr.bf16.mxu0 0
    %157 = vmatpush1.bf16.msra.mxu0 %v138
    %158 = vmatprep.subr.bf16.mxu0 0
    %159 = vmatpush1.bf16.msra.mxu0 %v139
    %160 = vmatprep.subr.bf16.mxu0 0
    %161 = vmatpush1.bf16.msra.mxu0 %v140
    %162 = vmatprep.subr.bf16.mxu0 0
    %163 = vmatpush1.bf16.msra.mxu0 %v141
    %164 = vmatprep.subr.bf16.mxu0 0
    %165 = vmatpush1.bf16.msra.mxu0 %v142
    %166 = vmatprep.subr.bf16.mxu0 0
    %167 = vmatpush1.bf16.msra.mxu0 %v143
    %168 = vmatprep.subr.bf16.mxu0 0
    %169 = vmatpush1.bf16.msra.mxu0 0
    %170 = vmatprep.subr.bf16.mxu0 0
    %171 = vmatpush1.bf16.msra.mxu0 0
    %172 = vmatprep.subr.bf16.mxu0 0
    %173 = vmatpush1.bf16.msra.mxu0 0
    %174 = vmatprep.subr.bf16.mxu0 0
    %175 = vmatpush1.bf16.msra.mxu0 0
    %176 = vmatprep.subr.bf16.mxu0 0
    %177 = vmatpush1.bf16.msra.mxu0 0
    %178 = vmatprep.subr.bf16.mxu0 0
    %179 = vmatpush1.bf16.msra.mxu0 0
    %180 = vmatprep.subr.bf16.mxu0 0
    %181 = vmatpush1.bf16.msra.mxu0 0
    %182 = vmatprep.subr.bf16.mxu0 0
    %183 = vmatpush1.bf16.msra.mxu0 0
    %184 = vmatprep.mubr.bf16.mxu0 0
    %185 = vmatmul.mubr.bf16.gmra.mrb[0].mxu0 %v87
    %v186 = vpop.f32.mrb[0].mxu0
    %v187 = vadd.f32 0.0, %v186
    %v188 = vpop.f32.mrb[0].mxu0
    %v189 = vpop.f32.mrb[0].mxu0
    %v190 = vadd.f32 0.0, %v189
    %v191 = vpop.f32.mrb[0].mxu0
    %192 = vdwg.mxu0
    %v195 = vunpack.c.l.b16 %v71
    %v196 = vunpack.c.l.b16 %v72
    %v197 = vpack.c.b16 %v196, %v195
    %199 = vst [vmem:[#allocation2] sm:$0xff] %v197
    %v200 = vpack.c.bf16 %v190, %v187
    %201 = vst [vmem:[#allocation2 + $0x8] sm:$0xff] %v200
    %v202 = vld [vmem:[#allocation2] sm:$0xff]
    %v203 = vld [vmem:[#allocation2 + $0x8] sm:$0xff]
    %v204 = vld [vmem:[#allocation6] sm:$0xff]
    %v205 = vld [vmem:[#allocation6 + $0x8] sm:$0xff]
    %v206 = vld [vmem:[#allocation6 + $0x10] sm:$0xff]
    %v207 = vld [vmem:[#allocation6 + $0x18] sm:$0xff]
    %v208 = vld [vmem:[#allocation6 + $0x20] sm:$0xff]
    %v209 = vld [vmem:[#allocation6 + $0x28] sm:$0xff]
    %v210 = vld [vmem:[#allocation6 + $0x30] sm:$0xff]
    %v211 = vld [vmem:[#allocation6 + $0x38] sm:$0xff]
    %v212 = vld [vmem:[#allocation6 + $0x40] sm:$0xff]
    %v213 = vld [vmem:[#allocation6 + $0x48] sm:$0xff]
    %v214 = vld [vmem:[#allocation6 + $0x50] sm:$0xff]
    %v215 = vld [vmem:[#allocation6 + $0x58] sm:$0xff]
    %v216 = vld [vmem:[#allocation6 + $0x60] sm:$0xff]
    %v217 = vld [vmem:[#allocation6 + $0x68] sm:$0xff]
    %v218 = vld [vmem:[#allocation6 + $0x70] sm:$0xff]
    %v219 = vld [vmem:[#allocation6 + $0x78] sm:$0xff]
    %v220 = vld [vmem:[#allocation6 + $0x80] sm:$0xff]
    %v221 = vld [vmem:[#allocation6 + $0x88] sm:$0xff]
    %v222 = vld [vmem:[#allocation6 + $0x90] sm:$0xff]
    %v223 = vld [vmem:[#allocation6 + $0x98] sm:$0xff]
    %v224 = vld [vmem:[#allocation6 + $0xa0] sm:$0xff]
    %v225 = vld [vmem:[#allocation6 + $0xa8] sm:$0xff]
    %v226 = vld [vmem:[#allocation6 + $0xb0] sm:$0xff]
    %v227 = vld [vmem:[#allocation6 + $0xb8] sm:$0xff]
    %v228 = vld [vmem:[#allocation6 + $0xc0] sm:$0xff]
    %v229 = vld [vmem:[#allocation6 + $0xc8] sm:$0xff]
    %v230 = vld [vmem:[#allocation6 + $0xd0] sm:$0xff]
    %v231 = vld [vmem:[#allocation6 + $0xd8] sm:$0xff]
    %v232 = vld [vmem:[#allocation6 + $0xe0] sm:$0xff]
    %v233 = vld [vmem:[#allocation6 + $0xe8] sm:$0xff]
    %v234 = vld [vmem:[#allocation6 + $0xf0] sm:$0xff]
    %v235 = vld [vmem:[#allocation6 + $0xf8] sm:$0xff]
    %v236 = vld [vmem:[%s4] sm:$0x3]
    %v238 = vlaneseq
    %v239 = vshrl.u32 %v238, 7
    %v240 = vsub.s32 0, %v239
    %v241 = vrot.slane %v236, %v240
    %v242 = vlaneseq
    %v243 = vshrl.u32 %v242, 7
    %v244 = vsub.s32 1, %v243
    %v245 = vrot.slane %v236, %v244
    %v280 = vunpack.c.l.b16 %v204
    %v281 = vunpack.c.h.b16 %v204
    %v282 = vunpack.c.l.b16 %v205
    %v283 = vunpack.c.h.b16 %v205
    %v284 = vunpack.c.l.b16 %v206
    %v285 = vunpack.c.h.b16 %v206
    %v286 = vunpack.c.l.b16 %v207
    %v287 = vunpack.c.h.b16 %v207
    %v288 = vunpack.c.l.b16 %v208
    %v289 = vunpack.c.h.b16 %v208
    %v290 = vunpack.c.l.b16 %v209
    %v291 = vunpack.c.h.b16 %v209
    %v292 = vunpack.c.l.b16 %v210
    %v293 = vunpack.c.h.b16 %v210
    %v294 = vunpack.c.l.b16 %v211
    %v295 = vunpack.c.h.b16 %v211
    %v296 = vunpack.c.l.b16 %v212
    %v297 = vunpack.c.h.b16 %v212
    %v298 = vunpack.c.l.b16 %v213
    %v299 = vunpack.c.h.b16 %v213
    %v300 = vunpack.c.l.b16 %v214
    %v301 = vunpack.c.h.b16 %v214
    %v302 = vunpack.c.l.b16 %v215
    %v303 = vunpack.c.h.b16 %v215
    %v304 = vunpack.c.l.b16 %v216
    %v305 = vunpack.c.h.b16 %v216
    %v306 = vunpack.c.l.b16 %v217
    %v307 = vunpack.c.h.b16 %v217
    %v308 = vunpack.c.l.b16 %v218
    %v309 = vunpack.c.h.b16 %v218
    %v310 = vunpack.c.l.b16 %v219
    %v311 = vunpack.c.h.b16 %v219
    %v312 = vunpack.c.l.b16 %v220
    %v313 = vunpack.c.h.b16 %v220
    %v314 = vunpack.c.l.b16 %v221
    %v315 = vunpack.c.h.b16 %v221
    %v316 = vunpack.c.l.b16 %v222
    %v317 = vunpack.c.h.b16 %v222
    %v318 = vunpack.c.l.b16 %v223
    %v319 = vunpack.c.h.b16 %v223
    %v320 = vunpack.c.l.b16 %v224
    %v321 = vunpack.c.h.b16 %v224
    %v322 = vunpack.c.l.b16 %v225
    %v323 = vunpack.c.h.b16 %v225
    %v324 = vunpack.c.l.b16 %v226
    %v325 = vunpack.c.h.b16 %v226
    %v326 = vunpack.c.l.b16 %v227
    %v327 = vunpack.c.h.b16 %v227
    %v328 = vunpack.c.l.b16 %v228
    %v329 = vunpack.c.h.b16 %v228
    %v330 = vunpack.c.l.b16 %v229
    %v331 = vunpack.c.h.b16 %v229
    %v332 = vunpack.c.l.b16 %v230
    %v333 = vunpack.c.h.b16 %v230
    %v334 = vunpack.c.l.b16 %v231
    %v335 = vunpack.c.h.b16 %v231
    %v336 = vunpack.c.l.b16 %v232
    %v337 = vunpack.c.h.b16 %v232
    %v338 = vunpack.c.l.b16 %v233
    %v339 = vunpack.c.h.b16 %v233
    %v340 = vunpack.c.l.b16 %v234
    %v341 = vunpack.c.h.b16 %v234
    %v342 = vunpack.c.l.b16 %v235
    %v343 = vunpack.c.h.b16 %v235
    %v344 = vpack.c.b16 %v282, %v280
    %v345 = vpack.c.b16 %v283, %v281
    %v346 = vpack.c.b16 %v286, %v284
    %v347 = vpack.c.b16 %v287, %v285
    %v348 = vpack.c.b16 %v290, %v288
    %v349 = vpack.c.b16 %v291, %v289
    %v350 = vpack.c.b16 %v294, %v292
    %v351 = vpack.c.b16 %v295, %v293
    %v352 = vpack.c.b16 %v298, %v296
    %v353 = vpack.c.b16 %v299, %v297
    %v354 = vpack.c.b16 %v302, %v300
    %v355 = vpack.c.b16 %v303, %v301
    %v356 = vpack.c.b16 %v306, %v304
    %v357 = vpack.c.b16 %v307, %v305
    %v358 = vpack.c.b16 %v310, %v308
    %v359 = vpack.c.b16 %v311, %v309
    %v360 = vpack.c.b16 %v314, %v312
    %v361 = vpack.c.b16 %v315, %v313
    %v362 = vpack.c.b16 %v318, %v316
    %v363 = vpack.c.b16 %v319, %v317
    %v364 = vpack.c.b16 %v322, %v320
    %v365 = vpack.c.b16 %v323, %v321
    %v366 = vpack.c.b16 %v326, %v324
    %v367 = vpack.c.b16 %v327, %v325
    %v368 = vpack.c.b16 %v330, %v328
    %v369 = vpack.c.b16 %v331, %v329
    %v370 = vpack.c.b16 %v334, %v332
    %v371 = vpack.c.b16 %v335, %v333
    %v372 = vpack.c.b16 %v338, %v336
    %v373 = vpack.c.b16 %v339, %v337
    %v374 = vpack.c.b16 %v342, %v340
    %v375 = vpack.c.b16 %v343, %v341
    %408 = vmatprep.subr.bf16.mxu0 %v345
    %409 = vmatpush1.bf16.msra.mxu0 %v344
    %410 = vmatprep.subr.bf16.mxu0 %v347
    %411 = vmatpush1.bf16.msra.mxu0 %v346
    %412 = vmatprep.subr.bf16.mxu0 %v349
    %413 = vmatpush1.bf16.msra.mxu0 %v348
    %414 = vmatprep.subr.bf16.mxu0 %v351
    %415 = vmatpush1.bf16.msra.mxu0 %v350
    %416 = vmatprep.subr.bf16.mxu0 %v353
    %417 = vmatpush1.bf16.msra.mxu0 %v352
    %418 = vmatprep.subr.bf16.mxu0 %v355
    %419 = vmatpush1.bf16.msra.mxu0 %v354
    %420 = vmatprep.subr.bf16.mxu0 %v357
    %421 = vmatpush1.bf16.msra.mxu0 %v356
    %422 = vmatprep.subr.bf16.mxu0 %v359
    %423 = vmatpush1.bf16.msra.mxu0 %v358
    %424 = vmatprep.subr.bf16.mxu0 %v361
    %425 = vmatpush1.bf16.msra.mxu0 %v360
    %426 = vmatprep.subr.bf16.mxu0 %v363
    %427 = vmatpush1.bf16.msra.mxu0 %v362
    %428 = vmatprep.subr.bf16.mxu0 %v365
    %429 = vmatpush1.bf16.msra.mxu0 %v364
    %430 = vmatprep.subr.bf16.mxu0 %v367
    %431 = vmatpush1.bf16.msra.mxu0 %v366
    %432 = vmatprep.subr.bf16.mxu0 %v369
    %433 = vmatpush1.bf16.msra.mxu0 %v368
    %434 = vmatprep.subr.bf16.mxu0 %v371
    %435 = vmatpush1.bf16.msra.mxu0 %v370
    %436 = vmatprep.subr.bf16.mxu0 %v373
    %437 = vmatpush1.bf16.msra.mxu0 %v372
    %438 = vmatprep.subr.bf16.mxu0 %v375
    %439 = vmatpush1.bf16.msra.mxu0 %v374
    %440 = vmatprep.mubr.bf16.mxu0 %v203
    %441 = vmatmul.mubr.bf16.gmra.mrb[0].mxu0 %v202
    %v442 = vpop.f32.mrb[0].mxu0
    %v443 = vadd.f32 %v241, %v442
    %v444 = vpop.f32.mrb[0].mxu0
    %v445 = vadd.f32 %v245, %v444
    %v446 = vpop.f32.mrb[0].mxu0
    %v447 = vadd.f32 %v241, %v446
    %v448 = vpop.f32.mrb[0].mxu0
    %v449 = vadd.f32 %v245, %v448
    %450 = vdwg.mxu0
    %v451 = vmax.f32 %v443, 0.0
    %v452 = vmax.f32 %v445, 0.0
    %v453 = vmax.f32 %v447, 0.0
    %v454 = vmax.f32 %v449, 0.0
    %v455 = vunpack.c.l.bf16 %v202
    %v456 = vunpack.c.l.bf16 %v203
    %v457 = vunpack.c.h.bf16 %v202
    %v458 = vunpack.c.h.bf16 %v203
    %v459 = vadd.f32 %v451, %v455
    %v460 = vadd.f32 %v452, %v456
    %v461 = vadd.f32 %v453, %v457
    %v462 = vadd.f32 %v454, %v458
    %v463 = vpack.c.bf16 %v461, %v459
    %v464 = vpack.c.bf16 %v462, %v460
    %v465 = vld [vmem:[#allocation8] sm:$0xf]
    %v466 = vld [vmem:[#allocation8 + $0x4] sm:$0xf]
    %v467 = vld [vmem:[#allocation8 + $0x8] sm:$0xf]
    %v468 = vld [vmem:[#allocation8 + $0xc] sm:$0xf]
    %v469 = vld [vmem:[#allocation8 + $0x10] sm:$0xf]
    %v470 = vld [vmem:[#allocation8 + $0x14] sm:$0xf]
    %v471 = vld [vmem:[#allocation8 + $0x18] sm:$0xf]
    %v472 = vld [vmem:[#allocation8 + $0x1c] sm:$0xf]
    %v473 = vld [vmem:[#allocation8 + $0x20] sm:$0xf]
    %v474 = vld [vmem:[#allocation8 + $0x24] sm:$0xf]
    %v475 = vld [vmem:[#allocation8 + $0x28] sm:$0xf]
    %v476 = vld [vmem:[#allocation8 + $0x2c] sm:$0xf]
    %v477 = vld [vmem:[#allocation8 + $0x30] sm:$0xf]
    %v478 = vld [vmem:[#allocation8 + $0x34] sm:$0xf]
    %v479 = vld [vmem:[#allocation8 + $0x38] sm:$0xf]
    %v480 = vld [vmem:[#allocation8 + $0x3c] sm:$0xf]
    %v481 = vld [vmem:[#allocation8 + $0x40] sm:$0xf]
    %v482 = vld [vmem:[#allocation8 + $0x44] sm:$0xf]
    %v483 = vld [vmem:[#allocation8 + $0x48] sm:$0xf]
    %v484 = vld [vmem:[#allocation8 + $0x4c] sm:$0xf]
    %v485 = vld [vmem:[#allocation8 + $0x50] sm:$0xf]
    %v486 = vld [vmem:[#allocation8 + $0x54] sm:$0xf]
    %v487 = vld [vmem:[#allocation8 + $0x58] sm:$0xf]
    %v488 = vld [vmem:[#allocation8 + $0x5c] sm:$0xf]
    %v489 = vld [vmem:[#allocation8 + $0x60] sm:$0xf]
    %v490 = vld [vmem:[#allocation8 + $0x64] sm:$0xf]
    %v491 = vld [vmem:[#allocation8 + $0x68] sm:$0xf]
    %v492 = vld [vmem:[#allocation8 + $0x6c] sm:$0xf]
    %v493 = vld [vmem:[#allocation8 + $0x70] sm:$0xf]
    %v494 = vld [vmem:[#allocation8 + $0x74] sm:$0xf]
    %v495 = vld [vmem:[#allocation8 + $0x78] sm:$0xf]
    %v496 = vld [vmem:[#allocation8 + $0x7c] sm:$0xf]
    %v497 = vld [vmem:[%s6] sm:$0x1]
    %v499 = vlaneseq
    %v500 = vshrl.u32 %v499, 7
    %v501 = vsub.s32 0, %v500
    %v502 = vrot.slane %v497, %v501
    %v536 = vunpack.c.l.b16 %v465
    %v537 = vunpack.c.l.b16 %v466
    %v538 = vunpack.c.l.b16 %v467
    %v539 = vunpack.c.l.b16 %v468
    %v540 = vunpack.c.l.b16 %v469
    %v541 = vunpack.c.l.b16 %v470
    %v542 = vunpack.c.l.b16 %v471
    %v543 = vunpack.c.l.b16 %v472
    %v544 = vunpack.c.l.b16 %v473
    %v545 = vunpack.c.l.b16 %v474
    %v546 = vunpack.c.l.b16 %v475
    %v547 = vunpack.c.l.b16 %v476
    %v548 = vunpack.c.l.b16 %v477
    %v549 = vunpack.c.l.b16 %v478
    %v550 = vunpack.c.l.b16 %v479
    %v551 = vunpack.c.l.b16 %v480
    %v552 = vunpack.c.l.b16 %v481
    %v553 = vunpack.c.l.b16 %v482
    %v554 = vunpack.c.l.b16 %v483
    %v555 = vunpack.c.l.b16 %v484
    %v556 = vunpack.c.l.b16 %v485
    %v557 = vunpack.c.l.b16 %v486
    %v558 = vunpack.c.l.b16 %v487
    %v559 = vunpack.c.l.b16 %v488
    %v560 = vunpack.c.l.b16 %v489
    %v561 = vunpack.c.l.b16 %v490
    %v562 = vunpack.c.l.b16 %v491
    %v563 = vunpack.c.l.b16 %v492
    %v564 = vunpack.c.l.b16 %v493
    %v565 = vunpack.c.l.b16 %v494
    %v566 = vunpack.c.l.b16 %v495
    %v567 = vunpack.c.l.b16 %v496
    %v568 = vpack.c.b16 %v537, %v536
    %v569 = vpack.c.b16 %v539, %v538
    %v570 = vpack.c.b16 %v541, %v540
    %v571 = vpack.c.b16 %v543, %v542
    %v572 = vpack.c.b16 %v545, %v544
    %v573 = vpack.c.b16 %v547, %v546
    %v574 = vpack.c.b16 %v549, %v548
    %v575 = vpack.c.b16 %v551, %v550
    %v576 = vpack.c.b16 %v553, %v552
    %v577 = vpack.c.b16 %v555, %v554
    %v578 = vpack.c.b16 %v557, %v556
    %v579 = vpack.c.b16 %v559, %v558
    %v580 = vpack.c.b16 %v561, %v560
    %v581 = vpack.c.b16 %v563, %v562
    %v582 = vpack.c.b16 %v565, %v564
    %v583 = vpack.c.b16 %v567, %v566
    %600 = vmatprep.subr.bf16.mxu0 0
    %601 = vmatpush1.bf16.msra.mxu0 %v568
    %602 = vmatprep.subr.bf16.mxu0 0
    %603 = vmatpush1.bf16.msra.mxu0 %v569
    %604 = vmatprep.subr.bf16.mxu0 0
    %605 = vmatpush1.bf16.msra.mxu0 %v570
    %606 = vmatprep.subr.bf16.mxu0 0
    %607 = vmatpush1.bf16.msra.mxu0 %v571
    %608 = vmatprep.subr.bf16.mxu0 0
    %609 = vmatpush1.bf16.msra.mxu0 %v572
    %610 = vmatprep.subr.bf16.mxu0 0
    %611 = vmatpush1.bf16.msra.mxu0 %v573
    %612 = vmatprep.subr.bf16.mxu0 0
    %613 = vmatpush1.bf16.msra.mxu0 %v574
    %614 = vmatprep.subr.bf16.mxu0 0
    %615 = vmatpush1.bf16.msra.mxu0 %v575
    %616 = vmatprep.subr.bf16.mxu0 0
    %617 = vmatpush1.bf16.msra.mxu0 %v576
    %618 = vmatprep.subr.bf16.mxu0 0
    %619 = vmatpush1.bf16.msra.mxu0 %v577
    %620 = vmatprep.subr.bf16.mxu0 0
    %621 = vmatpush1.bf16.msra.mxu0 %v578
    %622 = vmatprep.subr.bf16.mxu0 0
    %623 = vmatpush1.bf16.msra.mxu0 %v579
    %624 = vmatprep.subr.bf16.mxu0 0
    %625 = vmatpush1.bf16.msra.mxu0 %v580
    %626 = vmatprep.subr.bf16.mxu0 0
    %627 = vmatpush1.bf16.msra.mxu0 %v581
    %628 = vmatprep.subr.bf16.mxu0 0
    %629 = vmatpush1.bf16.msra.mxu0 %v582
    %630 = vmatprep.subr.bf16.mxu0 0
    %631 = vmatpush1.bf16.msra.mxu0 %v583
    %632 = vmatprep.mubr.bf16.mxu0 %v464
    %633 = vmatmul.mubr.bf16.gmra.mrb[0].mxu0 %v463
    %v634 = vpop.f32.mrb[0].mxu0
    %v635 = vadd.f32 %v502, %v634
    %v636 = vpop.f32.mrb[0].mxu0
    %v637 = vpop.f32.mrb[0].mxu0
    %v638 = vadd.f32 %v502, %v637
    %v639 = vpop.f32.mrb[0].mxu0
    %640 = vdwg.mxu0
    %641 = vst [vmem:[#allocation9] sm:$0xff] %v635
    %642 = vst [vmem:[#allocation9 + $0x8] sm:$0xff] %v638
    // Predicated region
    $region42: #{tpu_custom_call.1} parent=1 // pred_check
      _
    $region43: #{tpu_custom_call.1} parent=1 // pred_check_branch
      %644 = sbr.rel (0) target = $region45
    $region44: #{tpu_custom_call.1} parent=1 // pred_region
      %s646 = ssub.s32 256, 256
      %647 = vsyncadd [#allocation5], %s646
      %s648 = sshll.u32 [#allocation9], 4
      %s649 = int_to_ptr.vmem [resolvable:$true] %s648
      %654 = dma.vmem_to_hbm [thread:$0]  %s649, 256, %s7, [#allocation5], 128, 128, 8
    $region45: #{tpu_custom_call.1} parent=1 // pred_fallthru
      _
    // Predicated region
    $region46: #{tpu_custom_call.1} parent=1 // pred_check
      _
    $region47: #{tpu_custom_call.1} parent=1 // pred_check_branch
      %656 = sbr.rel (0) target = $region49
    $region48: #{tpu_custom_call.1} parent=1 // pred_region
      %657 = dma.done [#allocation5], 256
    $region49: #{tpu_custom_call.1} parent=1 // pred_fallthru
      _
    %658 = vsyncpa [#allocation4], 1
    %659 = vsyncpa [#allocation7], 1
    %660 = vsyncpa [#allocation5], 1

</llo_original>
